<compile_context>
chip_gen: v5e
topology: v5e:2x2
jax: 0.10.0
libtpu: 0.0.40
codegen_flags: <defaults>
</compile_context>

<pallas_src>
import functools
import math

import jax
import jax.numpy as jnp
from jax.experimental import pallas as pl
from jax.experimental.pallas import tpu as pltpu


def _fused_mask_kernel(pi_ref, sigma_ref, u_ref, z_ref, cnt_ref, *,
                       inv_temperature, eps):
    """One grid step == one layer.

    pi_ref    : VMEM (1, S, 1)    cumulative stick-breaking prob pi[:, l]
    sigma_ref : VMEM (1, 1, Npad) flattened sigma_k logits (padding = -1e4)
    u_ref     : VMEM (1, S, Npad) uniform noise in (0, 1)
    z_ref     : VMEM (1, S, Npad) relaxed-Bernoulli mask sample (output)
    cnt_ref   : VMEM (1, S, 128)  per-sample count of entries > eps,
                                  broadcast over lanes (output)
    """
    pi = pi_ref[0]          # (S, 1)
    sigma = sigma_ref[0]    # (1, Npad)
    u = u_ref[0]            # (S, Npad)

    # add_sigma_k_pi_expanded + RelaxedBernoulli logits, fused:
    # logit(sigmoid(logit(pi) + sigma)) == logit(pi) + sigma, so the adjusted
    # probability never has to be materialised (and can't saturate to 1.0).
    logit_pi = jnp.log(pi) - jnp.log(1.0 - pi)      # (S, 1), tiny
    adj_logit = logit_pi + sigma                     # (S, Npad) broadcast

    # Logistic noise for the reparameterised RelaxedBernoulli sample.
    logistic = jnp.log(u) - jnp.log(1.0 - u)         # (S, Npad)

    # Z = sigmoid((logits + logistic) / T), with 1/T precomputed host-side.
    z = 1.0 / (1.0 + jnp.exp(-(adj_logit + logistic) * inv_temperature))
    z_ref[0] = z

    # (Z_l > eps) count per sample; padded lanes give z == 0 and never count.
    cnt = (z > eps).astype(jnp.int32).sum(axis=-1, keepdims=True)    # (S, 1)
    cnt_ref[0] = jnp.broadcast_to(cnt, cnt_ref.shape[1:])            # (S, 128)


def _fused_sample(pi_lsq, sigma_slab, u_slab, *, inv_temperature, eps):
    """Single fused pallas_call over all layers.

    pi_lsq     : (L, S, 1)    f32
    sigma_slab : (L, 1, Npad) f32  (padded lanes = -1e4)
    u_slab     : (L, S, Npad) f32
    returns    : z_slab (L, S, Npad) f32, counts (L, S) int32
    """
    L, S, Npad = u_slab.shape
    kernel = functools.partial(_fused_mask_kernel,
                               inv_temperature=float(inv_temperature),
                               eps=float(eps))
    z_slab, cnt = pl.pallas_call(
        kernel,
        grid=(L,),
        out_shape=(jax.ShapeDtypeStruct((L, S, Npad), jnp.float32),
                   jax.ShapeDtypeStruct((L, S, 128), jnp.int32)),
        in_specs=[
            pl.BlockSpec((1, S, 1), lambda l: (l, 0, 0)),      # pi[:, l]
            pl.BlockSpec((1, 1, Npad), lambda l: (l, 0, 0)),   # sigma_k[l]
            pl.BlockSpec((1, S, Npad), lambda l: (l, 0, 0)),   # uniform noise
        ],
        out_specs=(
            pl.BlockSpec((1, S, Npad), lambda l: (l, 0, 0)),   # Z slab
            pl.BlockSpec((1, S, 128), lambda l: (l, 0, 0)),    # counts
        ),
        compiler_params=pltpu.CompilerParams(
            dimension_semantics=("parallel",)),                # layers independent
    )(pi_lsq, sigma_slab, u_slab)
    return z_slab, cnt[:, :, 0]


class NetworkStructureSamplerPallas:
    """JAX/Pallas re-implementation of NetworkStructureSampler.forward (training mode)."""

    _PAD_LOGIT = -1.0e4   # padded lanes -> z == 0 exactly -> never counted

    def __init__(self, args, weight_shape_ls):
        self.args = args
        self.eps = 0.01
        self.threshold = 0.05
        self.act_thresh = args["act_thresh"]
        self.posterior_temperature = float(args["posterior_temperature"])
        self.prior_temperature = float(args["prior_temperature"])
        self.n_train_samples = args["n_train_samples"]
        self.n_test_samples = args["n_test_samples"]
        self.conv_mask_type = args["conv_mask_type"]
        self.use_sigma_k = args["use_sigma_k"]
        self.training = True
        # TODO(synk): eval-mode (training=False) hard Bernoulli sampling not implemented.

        conv_shapes, fc_shapes = weight_shape_ls
        self.n_conv_layers = len(conv_shapes)
        self.n_fc_layers = len(fc_shapes)
        self.n_layers = self.n_conv_layers + self.n_fc_layers

        # Variational Beta parameters (deterministic init from a_prior/b_prior).
        alpha = math.log(math.exp(args["a_prior"]) - 1.0)
        beta = math.log(math.exp(args["b_prior"]) - 1.0)
        self.a_k = jnp.full((self.n_layers,), alpha, dtype=jnp.float32)
        self.b_k = jnp.full((self.n_layers,), beta, dtype=jnp.float32)

        # Mask shapes: conv -> (C_out, C_in) when 'single_per_channel', fc -> full.
        all_shapes = list(conv_shapes) + list(fc_shapes)
        self.mask_shapes = [
            tuple(s[:2]) if (i < self.n_conv_layers and
                             self.conv_mask_type == "single_per_channel")
            else tuple(s)
            for i, s in enumerate(all_shapes)
        ]
        self.flat_sizes = [math.prod(s) for s in self.mask_shapes]
        # Common lane-dense pad width (multiple of 128) for the fused slab.
        self._npad = max(128, -(-max(self.flat_sizes) // 128) * 128)

        # sigma_k: logit(0.1) everywhere (deterministic init); zeros if unused
        # (sigmoid(logit(pi) + 0) == pi, matching the use_sigma_k=False path).
        sigma_init_logit = math.log(0.1 / 0.9) if self.use_sigma_k else 0.0
        self.sigma_k = [jnp.full(s, sigma_init_logit, dtype=jnp.float32)
                        for s in self.mask_shapes]
        self.sigma_slab = self._build_sigma_slab()

        self._jit_forward = self._make_forward()

        # TODO(synk): self.kld_bernoulli side-effect (RelaxedBernoulli log_prob KL)
        # is not computed; forward's return values (Z, threshold) do not depend on it.

    def _build_sigma_slab(self):
        L, Npad = self.n_layers, self._npad
        slab = jnp.full((L, 1, Npad), self._PAD_LOGIT, dtype=jnp.float32)
        for l, sig in enumerate(self.sigma_k):
            n = self.flat_sizes[l]
            slab = slab.at[l, 0, :n].set(sig.reshape(-1).astype(jnp.float32))
        return slab

    def _make_forward(self):
        L = self.n_layers
        Npad = self._npad
        mask_shapes = tuple(self.mask_shapes)
        flat_sizes = tuple(self.flat_sizes)
        eps = float(self.eps)
        inv_temperature = 1.0 / float(self.posterior_temperature)

        def fwd(key, a_k_raw, b_k_raw, sigma_slab, *, n_samples):
            S = n_samples
            # variational_beta.rsample((n_samples,)) -> nu (S, L)
            a_k = jax.nn.softplus(a_k_raw) + eps
            b_k = jax.nn.softplus(b_k_raw) + eps
            key_beta, key_u = jax.random.split(key)
            nu = jax.random.beta(key_beta, a_k, b_k, shape=(S, L)).astype(jnp.float32)
            nu = jnp.clip(nu, 1e-6, 1.0 - 1e-6)

            # pi = exp(cumsum(log nu, dim=1))  (stick-breaking cumulative product)
            pi = jnp.exp(jnp.cumsum(jnp.log(nu), axis=1))
            pi = jnp.clip(pi, 1e-6, 1.0 - 1e-6)          # clamp_probs
            pi_lsq = jnp.transpose(pi)[:, :, None]        # (L, S, 1)

            # Uniform noise for the RelaxedBernoulli reparameterisation (one call).
            u = jax.random.uniform(key_u, (L, S, Npad), dtype=jnp.float32,
                                   minval=1e-6, maxval=1.0 - 1e-6)

            z_slab, counts = _fused_sample(pi_lsq, sigma_slab, u,
                                           inv_temperature=inv_temperature,
                                           eps=eps)

            # Slice padding off and reshape back to per-layer mask shapes.
            Z_ls = tuple(
                z_slab[l, :, :flat_sizes[l]].reshape((S,) + mask_shapes[l])
                for l in range(L))

            # threshold_Z = vstack([(Z_l > eps).sum(-1).sum(-1)]).T  -> (S, L)
            # (mask shapes here are 2-D per sample, so flatten-sum is identical)
            threshold_Z = counts.T                        # (S, L) int32
            threshold_array = (threshold_Z > 0).sum(axis=1)
            threshold = jnp.max(threshold_array)          # 0-d device int32
            return Z_ls, threshold

        return jax.jit(fwd, static_argnames=("n_samples",))

    def forward(self, key, n_samples=None):
        if n_samples is None:
            n_samples = self.n_train_samples if self.training else self.n_test_samples
        Z_ls, threshold = self._jit_forward(key, self.a_k, self.b_k,
                                            self.sigma_slab,
                                            n_samples=int(n_samples))
        # `threshold` is returned as a 0-d device array so the jitted forward
        # never forces a device->host sync; callers convert with int() if needed.
        return list(Z_ls), threshold


if __name__ == "__main__":
    args = {
        "act_thresh": 0.01,
        "prior_temperature": 1.0,
        "posterior_temperature": 0.67,
        "network_arch": "conv",
        "n_train_samples": 8,
        "n_test_samples": 4,
        "mask_type": "weight",
        "conv_mask_type": "single_per_channel",
        "use_sigma_k": True,
        "a_prior": 4.0,
        "b_prior": 1.0,
    }
    # Conv weights are OIHW (matching NCHW conv inputs); FC weights are (out, in).
    conv_weight_shapes = [(8, 4, 3, 3), (16, 8, 3, 3)]
    fc_weight_shapes = [(32, 64), (10, 32)]

    sampler = NetworkStructureSamplerPallas(args, (conv_weight_shapes, fc_weight_shapes))

    key = jax.random.PRNGKey(0)
    Z, threshold = sampler.forward(key)

    for z in Z:
        jax.block_until_ready(z)
    threshold = int(threshold)   # host sync deferred to the caller

    # Basic sanity checks on shapes / value ranges.
    expected_shapes = [(8, 8, 4), (8, 16, 8), (8, 32, 64), (8, 10, 32)]
    assert [tuple(z.shape) for z in Z] == expected_shapes, [tuple(z.shape) for z in Z]
    assert all(bool(jnp.all((z >= 0.0) & (z <= 1.0))) for z in Z)
    assert 0 <= threshold <= sampler.n_layers

    print("KERNEL_OK")
</pallas_src>

<mosaic_0001>
module attributes {stable_mosaic.version = 11 : i64} {
  func.func @_fused_mask_kernel(%arg0: i32, %arg1: memref<1x8x1xf32, #tpu.memory_space<vmem>>, %arg2: memref<1x1x2048xf32, #tpu.memory_space<vmem>>, %arg3: memref<1x8x2048xf32, #tpu.memory_space<vmem>>, %arg4: memref<1x8x2048xf32, #tpu.memory_space<vmem>>, %arg5: memref<1x8x128xi32, #tpu.memory_space<vmem>>) attributes {dimension_semantics = [#tpu.dimension_semantics<parallel>], iteration_bounds = array<i64: 4>, scalar_prefetch = 0 : i64, scratch_operands = 0 : i64, tpu.core_type = #tpu.core_type<tc>, window_params = [{transform_indices = @transform_0, window_bounds = array<i64: 1, 8, 1>}, {transform_indices = @transform_1, window_bounds = array<i64: 1, 1, 2048>}, {transform_indices = @transform_2, window_bounds = array<i64: 1, 8, 2048>}, {transform_indices = @transform_3, window_bounds = array<i64: 1, 8, 2048>}, {transform_indices = @transform_4, window_bounds = array<i64: 1, 8, 128>}]} {
    %c0 = arith.constant 0 : index
    %c0_0 = arith.constant 0 : index
    %c0_1 = arith.constant 0 : index
    %0 = vector.load %arg1[%c0, %c0_0, %c0_1] : memref<1x8x1xf32, #tpu.memory_space<vmem>>, vector<1x8x1xf32>
    %1 = vector.shape_cast %0 : vector<1x8x1xf32> to vector<8x1xf32>
    %c0_2 = arith.constant 0 : index
    %c0_3 = arith.constant 0 : index
    %c0_4 = arith.constant 0 : index
    %2 = vector.load %arg2[%c0_2, %c0_3, %c0_4] : memref<1x1x2048xf32, #tpu.memory_space<vmem>>, vector<1x1x2048xf32>
    %3 = vector.shape_cast %2 : vector<1x1x2048xf32> to vector<1x2048xf32>
    %c0_5 = arith.constant 0 : index
    %c0_6 = arith.constant 0 : index
    %c0_7 = arith.constant 0 : index
    %4 = vector.load %arg3[%c0_5, %c0_6, %c0_7] : memref<1x8x2048xf32, #tpu.memory_space<vmem>>, vector<1x8x2048xf32>
    %5 = vector.shape_cast %4 : vector<1x8x2048xf32> to vector<8x2048xf32>
    %6 = math.log %1 : vector<8x1xf32>
    %cst = arith.constant 1.000000e+00 : f32
    %7 = vector.broadcast %cst : f32 to vector<8x1xf32>
    %8 = arith.subf %7, %1 : vector<8x1xf32>
    %9 = math.log %8 : vector<8x1xf32>
    %10 = arith.subf %6, %9 : vector<8x1xf32>
    %11 = vector.broadcast %10 : vector<8x1xf32> to vector<8x2048xf32>
    %12 = vector.broadcast %3 : vector<1x2048xf32> to vector<8x2048xf32>
    %13 = arith.addf %11, %12 : vector<8x2048xf32>
    %14 = math.log %5 : vector<8x2048xf32>
    %cst_8 = arith.constant 1.000000e+00 : f32
    %15 = vector.broadcast %cst_8 : f32 to vector<8x2048xf32>
    %16 = arith.subf %15, %5 : vector<8x2048xf32>
    %17 = math.log %16 : vector<8x2048xf32>
    %18 = arith.subf %14, %17 : vector<8x2048xf32>
    %19 = arith.addf %13, %18 : vector<8x2048xf32>
    %cst_9 = arith.constant 0.000000e+00 : f32
    %20 = vector.broadcast %cst_9 : f32 to vector<8x2048xf32>
    %21 = arith.subf %20, %19 : vector<8x2048xf32>
    %cst_10 = arith.constant 1.49253726 : f32
    %22 = vector.broadcast %cst_10 : f32 to vector<8x2048xf32>
    %23 = arith.mulf %21, %22 : vector<8x2048xf32>
    %24 = math.exp %23 : vector<8x2048xf32>
    %cst_11 = arith.constant 1.000000e+00 : f32
    %25 = vector.broadcast %cst_11 : f32 to vector<8x2048xf32>
    %26 = arith.addf %25, %24 : vector<8x2048xf32>
    %cst_12 = arith.constant 1.000000e+00 : f32
    %27 = vector.broadcast %cst_12 : f32 to vector<8x2048xf32>
    %28 = arith.divf %27, %26 : vector<8x2048xf32>
    %c0_13 = arith.constant 0 : index
    %c0_14 = arith.constant 0 : index
    %c0_15 = arith.constant 0 : index
    %29 = vector.load %arg4[%c0_13, %c0_14, %c0_15] : memref<1x8x2048xf32, #tpu.memory_space<vmem>>, vector<1x8x2048xf32>
    %30 = vector.shape_cast %29 : vector<1x8x2048xf32> to vector<8x2048xf32>
    %31 = vector.shape_cast %28 : vector<8x2048xf32> to vector<1x8x2048xf32>
    tpu.vector_store %arg4[%c0_13, %c0_14, %c0_15], %31 {strides = array<i32>} : memref<1x8x2048xf32, #tpu.memory_space<vmem>>, vector<1x8x2048xf32>,
    %cst_16 = arith.constant 0.00999999977 : f32
    %32 = vector.broadcast %cst_16 : f32 to vector<8x2048xf32>
    %33 = arith.cmpf ogt, %28, %32 : vector<8x2048xf32>
    %34 = arith.extui %33 : vector<8x2048xi1> to vector<8x2048xi32>
    %cst_17 = arith.constant dense<0> : vector<8xi32>
    %35 = vector.multi_reduction <add>, %34, %cst_17 [1] : vector<8x2048xi32> to vector<8xi32>
    %36 = vector.shape_cast %35 : vector<8xi32> to vector<8x1xi32>
    %37 = vector.shape_cast %36 : vector<8x1xi32> to vector<8x1xi32>
    %38 = vector.broadcast %37 : vector<8x1xi32> to vector<8x128xi32>
    %c0_18 = arith.constant 0 : index
    %c0_19 = arith.constant 0 : index
    %c0_20 = arith.constant 0 : index
    %39 = vector.load %arg5[%c0_18, %c0_19, %c0_20] : memref<1x8x128xi32, #tpu.memory_space<vmem>>, vector<1x8x128xi32>
    %40 = vector.shape_cast %39 : vector<1x8x128xi32> to vector<8x128xi32>
    %41 = vector.shape_cast %38 : vector<8x128xi32> to vector<1x8x128xi32>
    tpu.vector_store %arg5[%c0_18, %c0_19, %c0_20], %41 {strides = array<i32>} : memref<1x8x128xi32, #tpu.memory_space<vmem>>, vector<1x8x128xi32>,
    return
  }
  func.func @transform_0(%arg0: i32) -> (i32, i32, i32) {
    %c0_i32 = arith.constant 0 : i32
    %c0_i32_0 = arith.constant 0 : i32
    %c0_i32_1 = arith.constant 0 : i32
    return %arg0, %c0_i32, %c0_i32_0 : i32, i32, i32
  }
  func.func @transform_1(%arg0: i32) -> (i32, i32, i32) {
    %c0_i32 = arith.constant 0 : i32
    %c0_i32_0 = arith.constant 0 : i32
    %c0_i32_1 = arith.constant 0 : i32
    return %arg0, %c0_i32, %c0_i32_0 : i32, i32, i32
  }
  func.func @transform_2(%arg0: i32) -> (i32, i32, i32) {
    %c0_i32 = arith.constant 0 : i32
    %c0_i32_0 = arith.constant 0 : i32
    %c0_i32_1 = arith.constant 0 : i32
    return %arg0, %c0_i32, %c0_i32_0 : i32, i32, i32
  }
  func.func @transform_3(%arg0: i32) -> (i32, i32, i32) {
    %c0_i32 = arith.constant 0 : i32
    %c0_i32_0 = arith.constant 0 : i32
    %c0_i32_1 = arith.constant 0 : i32
    return %arg0, %c0_i32, %c0_i32_0 : i32, i32, i32
  }
  func.func @transform_4(%arg0: i32) -> (i32, i32, i32) {
    %c0_i32 = arith.constant 0 : i32
    %c0_i32_0 = arith.constant 0 : i32
    %c0_i32_1 = arith.constant 0 : i32
    return %arg0, %c0_i32, %c0_i32_0 : i32, i32, i32
  }
}

</mosaic_0001>

<llo_original>
// kernel: squeeze.47
$region0: #{squeeze.47}
  %s0 = inlined_call_operand.vmem [shape: f32[1,8,320], index: 0, kind: input, shape index: {}]
  %s1 = inlined_call_operand.vmem [shape: f32[8,10,32], index: 1, kind: output, shape index: {}]
  %v2 = vld [vmem:[%s0] sm:$0xff]
  %vm3 = vcmask 261120
  %4 = vst.msk [vmem:[%s1] ss:$16 sm:$0x3] %vm3, %v2
  %5 = vst.msk [vmem:[%s1] ss:$16 sm:$0xc] %vm3, %v2
  %6 = vst.msk [vmem:[%s1] ss:$16 sm:$0x30] %vm3, %v2
  %7 = vst.msk [vmem:[%s1] ss:$16 sm:$0xc0] %vm3, %v2
  %s8 = scalar_lea.vmem %s0, 8
  %v9 = vld [vmem:[%s8] sm:$0xff]
  %vm10 = vcmask 261120
  %s11 = scalar_lea.vmem %s1, 4
  %12 = vst.msk [vmem:[%s11] ss:$16 sm:$0x3] %vm10, %v9
  %s13 = scalar_lea.vmem %s1, 4
  %14 = vst.msk [vmem:[%s13] ss:$16 sm:$0xc] %vm10, %v9
  %s15 = scalar_lea.vmem %s1, 4
  %16 = vst.msk [vmem:[%s15] ss:$16 sm:$0x30] %vm10, %v9
  %s17 = scalar_lea.vmem %s1, 4
  %18 = vst.msk [vmem:[%s17] ss:$16 sm:$0xc0] %vm10, %v9
  %s19 = scalar_lea.vmem %s0, 16
  %v20 = vld [vmem:[%s19] sm:$0xff]
  %vm21 = vcmask 261120
  %s22 = scalar_lea.vmem %s1, 8
  %23 = vst.msk [vmem:[%s22] ss:$16 sm:$0x3] %vm21, %v20
  %s24 = scalar_lea.vmem %s1, 8
  %25 = vst.msk [vmem:[%s24] ss:$16 sm:$0xc] %vm21, %v20
  %s26 = scalar_lea.vmem %s1, 8
  %27 = vst.msk [vmem:[%s26] ss:$16 sm:$0x30] %vm21, %v20
  %s28 = scalar_lea.vmem %s1, 8
  %29 = vst.msk [vmem:[%s28] ss:$16 sm:$0xc0] %vm21, %v20
  %v30 = vld [vmem:[%s0] ss:$8 sm:$0x7]
  %s31 = scalar_lea.vmem %s0, 4294967273
  %v32 = vld [vmem:[%s31] ss:$8 sm:$0x38]
  %vm33 = vcmask 1045507
  %v34 = vsel %vm33, %v32, %v30
  %s35 = scalar_lea.vmem %s0, 4294967250
  %s36 = smov 192
  %v37 = vld [vmem:[%s35] ss:$8 sm:%s36]
  %vm38 = vcmask 1047558
  %v39 = vsel %vm38, %v37, %v34
  %40 = vrot.lane.b32.xlu0 %v39, 96
  %v41 = vpop.permute.xlu0 %40
  %vm42 = vcmask 261120
  %s43 = scalar_lea.vmem %s1, 1
  %44 = vst.msk [vmem:[%s43] ss:$4 sm:$0x7] %vm42, %v41
  %s45 = scalar_lea.vmem %s1, 5
  %46 = vst.msk [vmem:[%s45] ss:$4 sm:$0x38] %vm42, %v41
  %s47 = scalar_lea.vmem %s1, 9
  %48 = vst.msk [vmem:[%s47] ss:$4 sm:$0xc0] %vm42, %v41
  %s49 = scalar_lea.vmem %s0, 3
  %v50 = vld.sshfl [vmem:[%s49] sm:$0xff pattern:$0x88880f91]
  %s51 = scalar_lea.vmem %s0, 6
  %v52 = vld.sshfl [vmem:[%s51] sm:$0xff pattern:$0x80dddddd]
  %vm53 = vcmask 1047557
  %v54 = vsel %vm53, %v52, %v50
  %55 = vrot.lane.b32.xlu0 %v54, 96
  %v56 = vpop.permute.xlu0 %55
  %vm57 = vcmask 261120
  %s58 = scalar_lea.vmem %s1, 65
  %59 = vst.msk [vmem:[%s58] ss:$4 sm:$0x3] %vm57, %v56
  %s60 = scalar_lea.vmem %s1, 25
  %61 = vst.msk [vmem:[%s60] ss:$8 sm:$0xc] %vm57, %v56
  %s62 = scalar_lea.vmem %s1, 37
  %63 = vst.msk [vmem:[%s62] ss:$4 sm:$0x30] %vm57, %v56
  %s64 = scalar_lea.vmem %s1, 73
  %65 = vst.msk [vmem:[%s64] ss:$4 sm:$0xc0] %vm57, %v56
  %s66 = scalar_lea.vmem %s0, 5
  %v67 = vld.sshfl [vmem:[%s66] sm:$0xff pattern:$0x8888880f]
  %s68 = scalar_lea.vmem %s0, 7
  %v69 = vld.sshfl [vmem:[%s68] sm:$0xff pattern:$0x880feeee]
  %vm70 = vcmask 1046531
  %v71 = vsel %vm70, %v69, %v67
  %s72 = scalar_lea.vmem %s0, 16
  %v73 = vld [vmem:[%s72] sm:$0x80]
  %vm74 = vcmask 1047559
  %v75 = vsel %vm74, %v73, %v71
  %76 = vrot.lane.b32.xlu0 %v75, 96
  %v77 = vpop.permute.xlu0 %76
  %vm78 = vcmask 261120
  %s79 = scalar_lea.vmem %s1, 73
  %80 = vst.msk [vmem:[%s79] ss:$8 sm:$0x3] %vm78, %v77
  %s81 = scalar_lea.vmem %s1, 77
  %82 = vst.msk [vmem:[%s81] ss:$4 sm:$0xc] %vm78, %v77
  %s83 = scalar_lea.vmem %s1, 73
  %84 = vst.msk [vmem:[%s83] ss:$8 sm:$0x30] %vm78, %v77
  %s85 = scalar_lea.vmem %s1, 93
  %86 = vst.msk [vmem:[%s85] ss:$4 sm:$0xc0] %vm78, %v77
  %v87 = vld.sshfl [vmem:[%s0] sm:$0xff pattern:$0xb3a29180]
  %88 = vrot.lane.b32.xlu0 %v87, 64
  %v89 = vpop.permute.xlu0 %88
  %vm90 = vcmask 261120
  %s91 = scalar_lea.vmem %s1, 2
  %92 = vst.msk [vmem:[%s91] ss:$4 sm:$0x3] %vm90, %v89
  %s93 = scalar_lea.vmem %s1, 10
  %94 = vst.msk [vmem:[%s93] ss:$4 sm:$0xc] %vm90, %v89
  %s95 = scalar_lea.vmem %s1, 18
  %96 = vst.msk [vmem:[%s95] ss:$4 sm:$0x30] %vm90, %v89
  %s97 = scalar_lea.vmem %s1, 26
  %98 = vst.msk [vmem:[%s97] ss:$4 sm:$0xc0] %vm90, %v89
  %s99 = scalar_lea.vmem %s0, 4
  %v100 = vld.sshfl [vmem:[%s99] sm:$0xff pattern:$0xb3a29180]
  %101 = vrot.lane.b32.xlu0 %v100, 64
  %v102 = vpop.permute.xlu0 %101
  %vm103 = vcmask 261120
  %s104 = scalar_lea.vmem %s1, 66
  %105 = vst.msk [vmem:[%s104] ss:$4 sm:$0x3] %vm103, %v102
  %s106 = scalar_lea.vmem %s1, 74
  %107 = vst.msk [vmem:[%s106] ss:$4 sm:$0xc] %vm103, %v102
  %s108 = scalar_lea.vmem %s1, 82
  %109 = vst.msk [vmem:[%s108] ss:$4 sm:$0x30] %vm103, %v102
  %s110 = scalar_lea.vmem %s1, 90
  %111 = vst.msk [vmem:[%s110] ss:$4 sm:$0xc0] %vm103, %v102
  %v112 = vld.sshfl [vmem:[%s0] sm:$0xff pattern:$0xb3a29180]
  %113 = vrot.lane.b32.xlu0 %v112, 32
  %v114 = vpop.permute.xlu0 %113
  %vm115 = vcmask 261120
  %s116 = scalar_lea.vmem %s1, 3
  %117 = vst.msk [vmem:[%s116] ss:$4 sm:$0x3] %vm115, %v114
  %s118 = scalar_lea.vmem %s1, 11
  %119 = vst.msk [vmem:[%s118] ss:$4 sm:$0xc] %vm115, %v114
  %s120 = scalar_lea.vmem %s1, 19
  %121 = vst.msk [vmem:[%s120] ss:$4 sm:$0x30] %vm115, %v114
  %s122 = scalar_lea.vmem %s1, 27
  %123 = vst.msk [vmem:[%s122] ss:$4 sm:$0xc0] %vm115, %v114
  %s124 = scalar_lea.vmem %s0, 4
  %v125 = vld.sshfl [vmem:[%s124] sm:$0xff pattern:$0xb3a29180]
  %126 = vrot.lane.b32.xlu0 %v125, 32
  %v127 = vpop.permute.xlu0 %126
  %vm128 = vcmask 261120
  %s129 = scalar_lea.vmem %s1, 67
  %130 = vst.msk [vmem:[%s129] ss:$4 sm:$0x3] %vm128, %v127
  %s131 = scalar_lea.vmem %s1, 75
  %132 = vst.msk [vmem:[%s131] ss:$4 sm:$0xc] %vm128, %v127
  %s133 = scalar_lea.vmem %s1, 83
  %134 = vst.msk [vmem:[%s133] ss:$4 sm:$0x30] %vm128, %v127
  %s135 = scalar_lea.vmem %s1, 91
  %136 = vst.msk [vmem:[%s135] ss:$4 sm:$0xc0] %vm128, %v127

// kernel: squeeze.45
$region0: #{squeeze.45}
  %s0 = inlined_call_operand.vmem [shape: f32[1,8,128], index: 0, kind: input, shape index: {}]
  %s1 = inlined_call_operand.vmem [shape: f32[8,16,8], index: 1, kind: output, shape index: {}]
  %v2 = vld [vmem:[%s0] sm:$0xff]
  %vm3 = vcmask 64512
  %4 = vst.msk [vmem:[%s1] ss:$16 sm:$0x3] %vm3, %v2
  %5 = vst.msk [vmem:[%s1] ss:$16 sm:$0xc] %vm3, %v2
  %6 = vst.msk [vmem:[%s1] ss:$16 sm:$0x30] %vm3, %v2
  %7 = vst.msk [vmem:[%s1] ss:$16 sm:$0xc0] %vm3, %v2
  %v8 = vld [vmem:[%s0] sm:$0xff]
  %9 = vrot.lane.b32.xlu0 %v8, 120
  %v10 = vpop.permute.xlu0 %9
  %vm11 = vcmask 64512
  %s12 = scalar_lea.vmem %s1, 1
  %13 = vst.msk [vmem:[%s12] ss:$16 sm:$0x3] %vm11, %v10
  %s14 = scalar_lea.vmem %s1, 1
  %15 = vst.msk [vmem:[%s14] ss:$16 sm:$0xc] %vm11, %v10
  %s16 = scalar_lea.vmem %s1, 1
  %17 = vst.msk [vmem:[%s16] ss:$16 sm:$0x30] %vm11, %v10
  %s18 = scalar_lea.vmem %s1, 1
  %19 = vst.msk [vmem:[%s18] ss:$16 sm:$0xc0] %vm11, %v10
  %v20 = vld [vmem:[%s0] sm:$0xff]
  %21 = vrot.lane.b32.xlu0 %v20, 112
  %v22 = vpop.permute.xlu0 %21
  %vm23 = vcmask 64512
  %s24 = scalar_lea.vmem %s1, 2
  %25 = vst.msk [vmem:[%s24] ss:$16 sm:$0x3] %vm23, %v22
  %s26 = scalar_lea.vmem %s1, 2
  %27 = vst.msk [vmem:[%s26] ss:$16 sm:$0xc] %vm23, %v22
  %s28 = scalar_lea.vmem %s1, 2
  %29 = vst.msk [vmem:[%s28] ss:$16 sm:$0x30] %vm23, %v22
  %s30 = scalar_lea.vmem %s1, 2
  %31 = vst.msk [vmem:[%s30] ss:$16 sm:$0xc0] %vm23, %v22
  %v32 = vld [vmem:[%s0] sm:$0xff]
  %33 = vrot.lane.b32.xlu0 %v32, 104
  %v34 = vpop.permute.xlu0 %33
  %vm35 = vcmask 64512
  %s36 = scalar_lea.vmem %s1, 3
  %37 = vst.msk [vmem:[%s36] ss:$16 sm:$0x3] %vm35, %v34
  %s38 = scalar_lea.vmem %s1, 3
  %39 = vst.msk [vmem:[%s38] ss:$16 sm:$0xc] %vm35, %v34
  %s40 = scalar_lea.vmem %s1, 3
  %41 = vst.msk [vmem:[%s40] ss:$16 sm:$0x30] %vm35, %v34
  %s42 = scalar_lea.vmem %s1, 3
  %43 = vst.msk [vmem:[%s42] ss:$16 sm:$0xc0] %vm35, %v34
  %v44 = vld [vmem:[%s0] sm:$0xff]
  %45 = vrot.lane.b32.xlu0 %v44, 96
  %v46 = vpop.permute.xlu0 %45
  %vm47 = vcmask 64512
  %s48 = scalar_lea.vmem %s1, 4
  %49 = vst.msk [vmem:[%s48] ss:$16 sm:$0x3] %vm47, %v46
  %s50 = scalar_lea.vmem %s1, 4
  %51 = vst.msk [vmem:[%s50] ss:$16 sm:$0xc] %vm47, %v46
  %s52 = scalar_lea.vmem %s1, 4
  %53 = vst.msk [vmem:[%s52] ss:$16 sm:$0x30] %vm47, %v46
  %s54 = scalar_lea.vmem %s1, 4
  %55 = vst.msk [vmem:[%s54] ss:$16 sm:$0xc0] %vm47, %v46
  %v56 = vld [vmem:[%s0] sm:$0xff]
  %57 = vrot.lane.b32.xlu0 %v56, 88
  %v58 = vpop.permute.xlu0 %57
  %vm59 = vcmask 64512
  %s60 = scalar_lea.vmem %s1, 5
  %61 = vst.msk [vmem:[%s60] ss:$16 sm:$0x3] %vm59, %v58
  %s62 = scalar_lea.vmem %s1, 5
  %63 = vst.msk [vmem:[%s62] ss:$16 sm:$0xc] %vm59, %v58
  %s64 = scalar_lea.vmem %s1, 5
  %65 = vst.msk [vmem:[%s64] ss:$16 sm:$0x30] %vm59, %v58
  %s66 = scalar_lea.vmem %s1, 5
  %67 = vst.msk [vmem:[%s66] ss:$16 sm:$0xc0] %vm59, %v58
  %v68 = vld [vmem:[%s0] sm:$0xff]
  %69 = vrot.lane.b32.xlu0 %v68, 80
  %v70 = vpop.permute.xlu0 %69
  %vm71 = vcmask 64512
  %s72 = scalar_lea.vmem %s1, 6
  %73 = vst.msk [vmem:[%s72] ss:$16 sm:$0x3] %vm71, %v70
  %s74 = scalar_lea.vmem %s1, 6
  %75 = vst.msk [vmem:[%s74] ss:$16 sm:$0xc] %vm71, %v70
  %s76 = scalar_lea.vmem %s1, 6
  %77 = vst.msk [vmem:[%s76] ss:$16 sm:$0x30] %vm71, %v70
  %s78 = scalar_lea.vmem %s1, 6
  %79 = vst.msk [vmem:[%s78] ss:$16 sm:$0xc0] %vm71, %v70
  %v80 = vld [vmem:[%s0] sm:$0xff]
  %81 = vrot.lane.b32.xlu0 %v80, 72
  %v82 = vpop.permute.xlu0 %81
  %vm83 = vcmask 64512
  %s84 = scalar_lea.vmem %s1, 7
  %85 = vst.msk [vmem:[%s84] ss:$16 sm:$0x3] %vm83, %v82
  %s86 = scalar_lea.vmem %s1, 7
  %87 = vst.msk [vmem:[%s86] ss:$16 sm:$0xc] %vm83, %v82
  %s88 = scalar_lea.vmem %s1, 7
  %89 = vst.msk [vmem:[%s88] ss:$16 sm:$0x30] %vm83, %v82
  %s90 = scalar_lea.vmem %s1, 7
  %91 = vst.msk [vmem:[%s90] ss:$16 sm:$0xc0] %vm83, %v82
  %v92 = vld [vmem:[%s0] sm:$0xff]
  %93 = vrot.lane.b32.xlu0 %v92, 64
  %v94 = vpop.permute.xlu0 %93
  %vm95 = vcmask 64512
  %s96 = scalar_lea.vmem %s1, 8
  %97 = vst.msk [vmem:[%s96] ss:$16 sm:$0x3] %vm95, %v94
  %s98 = scalar_lea.vmem %s1, 8
  %99 = vst.msk [vmem:[%s98] ss:$16 sm:$0xc] %vm95, %v94
  %s100 = scalar_lea.vmem %s1, 8
  %101 = vst.msk [vmem:[%s100] ss:$16 sm:$0x30] %vm95, %v94
  %s102 = scalar_lea.vmem %s1, 8
  %103 = vst.msk [vmem:[%s102] ss:$16 sm:$0xc0] %vm95, %v94
  %v104 = vld [vmem:[%s0] sm:$0xff]
  %105 = vrot.lane.b32.xlu0 %v104, 56
  %v106 = vpop.permute.xlu0 %105
  %vm107 = vcmask 64512
  %s108 = scalar_lea.vmem %s1, 9
  %109 = vst.msk [vmem:[%s108] ss:$16 sm:$0x3] %vm107, %v106
  %s110 = scalar_lea.vmem %s1, 9
  %111 = vst.msk [vmem:[%s110] ss:$16 sm:$0xc] %vm107, %v106
  %s112 = scalar_lea.vmem %s1, 9
  %113 = vst.msk [vmem:[%s112] ss:$16 sm:$0x30] %vm107, %v106
  %s114 = scalar_lea.vmem %s1, 9
  %115 = vst.msk [vmem:[%s114] ss:$16 sm:$0xc0] %vm107, %v106
  %v116 = vld [vmem:[%s0] sm:$0xff]
  %117 = vrot.lane.b32.xlu0 %v116, 48
  %v118 = vpop.permute.xlu0 %117
  %vm119 = vcmask 64512
  %s120 = scalar_lea.vmem %s1, 10
  %121 = vst.msk [vmem:[%s120] ss:$16 sm:$0x3] %vm119, %v118
  %s122 = scalar_lea.vmem %s1, 10
  %123 = vst.msk [vmem:[%s122] ss:$16 sm:$0xc] %vm119, %v118
  %s124 = scalar_lea.vmem %s1, 10
  %125 = vst.msk [vmem:[%s124] ss:$16 sm:$0x30] %vm119, %v118
  %s126 = scalar_lea.vmem %s1, 10
  %127 = vst.msk [vmem:[%s126] ss:$16 sm:$0xc0] %vm119, %v118
  %v128 = vld [vmem:[%s0] sm:$0xff]
  %129 = vrot.lane.b32.xlu0 %v128, 40
  %v130 = vpop.permute.xlu0 %129
  %vm131 = vcmask 64512
  %s132 = scalar_lea.vmem %s1, 11
  %133 = vst.msk [vmem:[%s132] ss:$16 sm:$0x3] %vm131, %v130
  %s134 = scalar_lea.vmem %s1, 11
  %135 = vst.msk [vmem:[%s134] ss:$16 sm:$0xc] %vm131, %v130
  %s136 = scalar_lea.vmem %s1, 11
  %137 = vst.msk [vmem:[%s136] ss:$16 sm:$0x30] %vm131, %v130
  %s138 = scalar_lea.vmem %s1, 11
  %139 = vst.msk [vmem:[%s138] ss:$16 sm:$0xc0] %vm131, %v130
  %v140 = vld [vmem:[%s0] sm:$0xff]
  %141 = vrot.lane.b32.xlu0 %v140, 32
  %v142 = vpop.permute.xlu0 %141
  %vm143 = vcmask 64512
  %s144 = scalar_lea.vmem %s1, 12
  %145 = vst.msk [vmem:[%s144] ss:$16 sm:$0x3] %vm143, %v142
  %s146 = scalar_lea.vmem %s1, 12
  %147 = vst.msk [vmem:[%s146] ss:$16 sm:$0xc] %vm143, %v142
  %s148 = scalar_lea.vmem %s1, 12
  %149 = vst.msk [vmem:[%s148] ss:$16 sm:$0x30] %vm143, %v142
  %s150 = scalar_lea.vmem %s1, 12
  %151 = vst.msk [vmem:[%s150] ss:$16 sm:$0xc0] %vm143, %v142
  %v152 = vld [vmem:[%s0] sm:$0xff]
  %153 = vrot.lane.b32.xlu0 %v152, 24
  %v154 = vpop.permute.xlu0 %153
  %vm155 = vcmask 64512
  %s156 = scalar_lea.vmem %s1, 13
  %157 = vst.msk [vmem:[%s156] ss:$16 sm:$0x3] %vm155, %v154
  %s158 = scalar_lea.vmem %s1, 13
  %159 = vst.msk [vmem:[%s158] ss:$16 sm:$0xc] %vm155, %v154
  %s160 = scalar_lea.vmem %s1, 13
  %161 = vst.msk [vmem:[%s160] ss:$16 sm:$0x30] %vm155, %v154
  %s162 = scalar_lea.vmem %s1, 13
  %163 = vst.msk [vmem:[%s162] ss:$16 sm:$0xc0] %vm155, %v154
  %v164 = vld [vmem:[%s0] sm:$0xff]
  %165 = vrot.lane.b32.xlu0 %v164, 16
  %v166 = vpop.permute.xlu0 %165
  %vm167 = vcmask 64512
  %s168 = scalar_lea.vmem %s1, 14
  %169 = vst.msk [vmem:[%s168] ss:$16 sm:$0x3] %vm167, %v166
  %s170 = scalar_lea.vmem %s1, 14
  %171 = vst.msk [vmem:[%s170] ss:$16 sm:$0xc] %vm167, %v166
  %s172 = scalar_lea.vmem %s1, 14
  %173 = vst.msk [vmem:[%s172] ss:$16 sm:$0x30] %vm167, %v166
  %s174 = scalar_lea.vmem %s1, 14
  %175 = vst.msk [vmem:[%s174] ss:$16 sm:$0xc0] %vm167, %v166
  %v176 = vld [vmem:[%s0] sm:$0xff]
  %177 = vrot.lane.b32.xlu0 %v176, 8
  %v178 = vpop.permute.xlu0 %177
  %vm179 = vcmask 64512
  %s180 = scalar_lea.vmem %s1, 15
  %181 = vst.msk [vmem:[%s180] ss:$16 sm:$0x3] %vm179, %v178
  %s182 = scalar_lea.vmem %s1, 15
  %183 = vst.msk [vmem:[%s182] ss:$16 sm:$0xc] %vm179, %v178
  %s184 = scalar_lea.vmem %s1, 15
  %185 = vst.msk [vmem:[%s184] ss:$16 sm:$0x30] %vm179, %v178
  %s186 = scalar_lea.vmem %s1, 15
  %187 = vst.msk [vmem:[%s186] ss:$16 sm:$0xc0] %vm179, %v178

// kernel: squeeze.46
$region0: #{squeeze.46}
  %s0 = inlined_call_operand.vmem [shape: f32[1,8,2048], index: 0, kind: input, shape index: {}]
  %s1 = inlined_call_operand.hbm [shape: f32[8,32,64], index: 1, kind: output, shape index: {}]
  $region1: #{squeeze.46} parent=0
    #allocation0 [shape = 'u8[131072]{0}', space=vmem, size = 0x20000, scoped, tag = 'operand span for operand 1']
    #allocation1 [shape = 's32[1]{0}', space=sflag, size = 0x4, scoped, tag = 'scoped memory for squeeze.46']
    %2 = vsyncpa [#allocation1], 0
    %v3 = vld [vmem:[%s0] sm:$0xff]
    %vm4 = vcmask 523264
    %5 = vst.msk [vmem:[#allocation0] sm:$0x1] %vm4, %v3
    %s6 = scalar_lea.vmem [#allocation0], 31
    %7 = vst.msk [vmem:[%s6] sm:$0x2] %vm4, %v3
    %s8 = scalar_lea.vmem [#allocation0], 62
    %9 = vst.msk [vmem:[%s8] sm:$0x4] %vm4, %v3
    %s10 = scalar_lea.vmem [#allocation0], 93
    %11 = vst.msk [vmem:[%s10] sm:$0x8] %vm4, %v3
    %s12 = scalar_lea.vmem [#allocation0], 124
    %13 = vst.msk [vmem:[%s12] sm:$0x10] %vm4, %v3
    %s14 = scalar_lea.vmem [#allocation0], 155
    %15 = vst.msk [vmem:[%s14] sm:$0x20] %vm4, %v3
    %s16 = scalar_lea.vmem [#allocation0], 186
    %17 = vst.msk [vmem:[%s16] sm:$0x40] %vm4, %v3
    %s18 = scalar_lea.vmem [#allocation0], 217
    %19 = vst.msk [vmem:[%s18] sm:$0x80] %vm4, %v3
    %s20 = scalar_lea.vmem %s0, 8
    %v21 = vld [vmem:[%s20] sm:$0xff]
    %vm22 = vcmask 523264
    %s23 = scalar_lea.vmem [#allocation0], 2
    %24 = vst.msk [vmem:[%s23] sm:$0x1] %vm22, %v21
    %s25 = scalar_lea.vmem [#allocation0], 33
    %26 = vst.msk [vmem:[%s25] sm:$0x2] %vm22, %v21
    %s27 = scalar_lea.vmem [#allocation0], 64
    %28 = vst.msk [vmem:[%s27] sm:$0x4] %vm22, %v21
    %s29 = scalar_lea.vmem [#allocation0], 95
    %30 = vst.msk [vmem:[%s29] sm:$0x8] %vm22, %v21
    %s31 = scalar_lea.vmem [#allocation0], 126
    %32 = vst.msk [vmem:[%s31] sm:$0x10] %vm22, %v21
    %s33 = scalar_lea.vmem [#allocation0], 157
    %34 = vst.msk [vmem:[%s33] sm:$0x20] %vm22, %v21
    %s35 = scalar_lea.vmem [#allocation0], 188
    %36 = vst.msk [vmem:[%s35] sm:$0x40] %vm22, %v21
    %s37 = scalar_lea.vmem [#allocation0], 219
    %38 = vst.msk [vmem:[%s37] sm:$0x80] %vm22, %v21
    %s39 = scalar_lea.vmem %s0, 16
    %v40 = vld [vmem:[%s39] sm:$0xff]
    %vm41 = vcmask 523264
    %s42 = scalar_lea.vmem [#allocation0], 4
    %43 = vst.msk [vmem:[%s42] sm:$0x1] %vm41, %v40
    %s44 = scalar_lea.vmem [#allocation0], 35
    %45 = vst.msk [vmem:[%s44] sm:$0x2] %vm41, %v40
    %s46 = scalar_lea.vmem [#allocation0], 66
    %47 = vst.msk [vmem:[%s46] sm:$0x4] %vm41, %v40
    %s48 = scalar_lea.vmem [#allocation0], 97
    %49 = vst.msk [vmem:[%s48] sm:$0x8] %vm41, %v40
    %s50 = scalar_lea.vmem [#allocation0], 128
    %51 = vst.msk [vmem:[%s50] sm:$0x10] %vm41, %v40
    %s52 = scalar_lea.vmem [#allocation0], 159
    %53 = vst.msk [vmem:[%s52] sm:$0x20] %vm41, %v40
    %s54 = scalar_lea.vmem [#allocation0], 190
    %55 = vst.msk [vmem:[%s54] sm:$0x40] %vm41, %v40
    %s56 = scalar_lea.vmem [#allocation0], 221
    %57 = vst.msk [vmem:[%s56] sm:$0x80] %vm41, %v40
    %s58 = scalar_lea.vmem %s0, 24
    %v59 = vld [vmem:[%s58] sm:$0xff]
    %vm60 = vcmask 523264
    %s61 = scalar_lea.vmem [#allocation0], 6
    %62 = vst.msk [vmem:[%s61] sm:$0x1] %vm60, %v59
    %s63 = scalar_lea.vmem [#allocation0], 37
    %64 = vst.msk [vmem:[%s63] sm:$0x2] %vm60, %v59
    %s65 = scalar_lea.vmem [#allocation0], 68
    %66 = vst.msk [vmem:[%s65] sm:$0x4] %vm60, %v59
    %s67 = scalar_lea.vmem [#allocation0], 99
    %68 = vst.msk [vmem:[%s67] sm:$0x8] %vm60, %v59
    %s69 = scalar_lea.vmem [#allocation0], 130
    %70 = vst.msk [vmem:[%s69] sm:$0x10] %vm60, %v59
    %s71 = scalar_lea.vmem [#allocation0], 161
    %72 = vst.msk [vmem:[%s71] sm:$0x20] %vm60, %v59
    %s73 = scalar_lea.vmem [#allocation0], 192
    %74 = vst.msk [vmem:[%s73] sm:$0x40] %vm60, %v59
    %s75 = scalar_lea.vmem [#allocation0], 223
    %76 = vst.msk [vmem:[%s75] sm:$0x80] %vm60, %v59
    %s77 = scalar_lea.vmem %s0, 32
    %v78 = vld [vmem:[%s77] sm:$0xff]
    %vm79 = vcmask 523264
    %s80 = scalar_lea.vmem [#allocation0], 8
    %81 = vst.msk [vmem:[%s80] sm:$0x1] %vm79, %v78
    %s82 = scalar_lea.vmem [#allocation0], 39
    %83 = vst.msk [vmem:[%s82] sm:$0x2] %vm79, %v78
    %s84 = scalar_lea.vmem [#allocation0], 70
    %85 = vst.msk [vmem:[%s84] sm:$0x4] %vm79, %v78
    %s86 = scalar_lea.vmem [#allocation0], 101
    %87 = vst.msk [vmem:[%s86] sm:$0x8] %vm79, %v78
    %s88 = scalar_lea.vmem [#allocation0], 132
    %89 = vst.msk [vmem:[%s88] sm:$0x10] %vm79, %v78
    %s90 = scalar_lea.vmem [#allocation0], 163
    %91 = vst.msk [vmem:[%s90] sm:$0x20] %vm79, %v78
    %s92 = scalar_lea.vmem [#allocation0], 194
    %93 = vst.msk [vmem:[%s92] sm:$0x40] %vm79, %v78
    %s94 = scalar_lea.vmem [#allocation0], 225
    %95 = vst.msk [vmem:[%s94] sm:$0x80] %vm79, %v78
    %s96 = scalar_lea.vmem %s0, 40
    %v97 = vld [vmem:[%s96] sm:$0xff]
    %vm98 = vcmask 523264
    %s99 = scalar_lea.vmem [#allocation0], 10
    %100 = vst.msk [vmem:[%s99] sm:$0x1] %vm98, %v97
    %s101 = scalar_lea.vmem [#allocation0], 41
    %102 = vst.msk [vmem:[%s101] sm:$0x2] %vm98, %v97
    %s103 = scalar_lea.vmem [#allocation0], 72
    %104 = vst.msk [vmem:[%s103] sm:$0x4] %vm98, %v97
    %s105 = scalar_lea.vmem [#allocation0], 103
    %106 = vst.msk [vmem:[%s105] sm:$0x8] %vm98, %v97
    %s107 = scalar_lea.vmem [#allocation0], 134
    %108 = vst.msk [vmem:[%s107] sm:$0x10] %vm98, %v97
    %s109 = scalar_lea.vmem [#allocation0], 165
    %110 = vst.msk [vmem:[%s109] sm:$0x20] %vm98, %v97
    %s111 = scalar_lea.vmem [#allocation0], 196
    %112 = vst.msk [vmem:[%s111] sm:$0x40] %vm98, %v97
    %s113 = scalar_lea.vmem [#allocation0], 227
    %114 = vst.msk [vmem:[%s113] sm:$0x80] %vm98, %v97
    %s115 = scalar_lea.vmem %s0, 48
    %v116 = vld [vmem:[%s115] sm:$0xff]
    %vm117 = vcmask 523264
    %s118 = scalar_lea.vmem [#allocation0], 12
    %119 = vst.msk [vmem:[%s118] sm:$0x1] %vm117, %v116
    %s120 = scalar_lea.vmem [#allocation0], 43
    %121 = vst.msk [vmem:[%s120] sm:$0x2] %vm117, %v116
    %s122 = scalar_lea.vmem [#allocation0], 74
    %123 = vst.msk [vmem:[%s122] sm:$0x4] %vm117, %v116
    %s124 = scalar_lea.vmem [#allocation0], 105
    %125 = vst.msk [vmem:[%s124] sm:$0x8] %vm117, %v116
    %s126 = scalar_lea.vmem [#allocation0], 136
    %127 = vst.msk [vmem:[%s126] sm:$0x10] %vm117, %v116
    %s128 = scalar_lea.vmem [#allocation0], 167
    %129 = vst.msk [vmem:[%s128] sm:$0x20] %vm117, %v116
    %s130 = scalar_lea.vmem [#allocation0], 198
    %131 = vst.msk [vmem:[%s130] sm:$0x40] %vm117, %v116
    %s132 = scalar_lea.vmem [#allocation0], 229
    %133 = vst.msk [vmem:[%s132] sm:$0x80] %vm117, %v116
    %s134 = scalar_lea.vmem %s0, 56
    %v135 = vld [vmem:[%s134] sm:$0xff]
    %vm136 = vcmask 523264
    %s137 = scalar_lea.vmem [#allocation0], 14
    %138 = vst.msk [vmem:[%s137] sm:$0x1] %vm136, %v135
    %s139 = scalar_lea.vmem [#allocation0], 45
    %140 = vst.msk [vmem:[%s139] sm:$0x2] %vm136, %v135
    %s141 = scalar_lea.vmem [#allocation0], 76
    %142 = vst.msk [vmem:[%s141] sm:$0x4] %vm136, %v135
    %s143 = scalar_lea.vmem [#allocation0], 107
    %144 = vst.msk [vmem:[%s143] sm:$0x8] %vm136, %v135
    %s145 = scalar_lea.vmem [#allocation0], 138
    %146 = vst.msk [vmem:[%s145] sm:$0x10] %vm136, %v135
    %s147 = scalar_lea.vmem [#allocation0], 169
    %148 = vst.msk [vmem:[%s147] sm:$0x20] %vm136, %v135
    %s149 = scalar_lea.vmem [#allocation0], 200
    %150 = vst.msk [vmem:[%s149] sm:$0x40] %vm136, %v135
    %s151 = scalar_lea.vmem [#allocation0], 231
    %152 = vst.msk [vmem:[%s151] sm:$0x80] %vm136, %v135
    %s153 = scalar_lea.vmem %s0, 64
    %v154 = vld [vmem:[%s153] sm:$0xff]
    %vm155 = vcmask 523264
    %s156 = scalar_lea.vmem [#allocation0], 16
    %157 = vst.msk [vmem:[%s156] sm:$0x1] %vm155, %v154
    %s158 = scalar_lea.vmem [#allocation0], 47
    %159 = vst.msk [vmem:[%s158] sm:$0x2] %vm155, %v154
    %s160 = scalar_lea.vmem [#allocation0], 78
    %161 = vst.msk [vmem:[%s160] sm:$0x4] %vm155, %v154
    %s162 = scalar_lea.vmem [#allocation0], 109
    %163 = vst.msk [vmem:[%s162] sm:$0x8] %vm155, %v154
    %s164 = scalar_lea.vmem [#allocation0], 140
    %165 = vst.msk [vmem:[%s164] sm:$0x10] %vm155, %v154
    %s166 = scalar_lea.vmem [#allocation0], 171
    %167 = vst.msk [vmem:[%s166] sm:$0x20] %vm155, %v154
    %s168 = scalar_lea.vmem [#allocation0], 202
    %169 = vst.msk [vmem:[%s168] sm:$0x40] %vm155, %v154
    %s170 = scalar_lea.vmem [#allocation0], 233
    %171 = vst.msk [vmem:[%s170] sm:$0x80] %vm155, %v154
    %s172 = scalar_lea.vmem %s0, 72
    %v173 = vld [vmem:[%s172] sm:$0xff]
    %vm174 = vcmask 523264
    %s175 = scalar_lea.vmem [#allocation0], 18
    %176 = vst.msk [vmem:[%s175] sm:$0x1] %vm174, %v173
    %s177 = scalar_lea.vmem [#allocation0], 49
    %178 = vst.msk [vmem:[%s177] sm:$0x2] %vm174, %v173
    %s179 = scalar_lea.vmem [#allocation0], 80
    %180 = vst.msk [vmem:[%s179] sm:$0x4] %vm174, %v173
    %s181 = scalar_lea.vmem [#allocation0], 111
    %182 = vst.msk [vmem:[%s181] sm:$0x8] %vm174, %v173
    %s183 = scalar_lea.vmem [#allocation0], 142
    %184 = vst.msk [vmem:[%s183] sm:$0x10] %vm174, %v173
    %s185 = scalar_lea.vmem [#allocation0], 173
    %186 = vst.msk [vmem:[%s185] sm:$0x20] %vm174, %v173
    %s187 = scalar_lea.vmem [#allocation0], 204
    %188 = vst.msk [vmem:[%s187] sm:$0x40] %vm174, %v173
    %s189 = scalar_lea.vmem [#allocation0], 235
    %190 = vst.msk [vmem:[%s189] sm:$0x80] %vm174, %v173
    %s191 = scalar_lea.vmem %s0, 80
    %v192 = vld [vmem:[%s191] sm:$0xff]
    %vm193 = vcmask 523264
    %s194 = scalar_lea.vmem [#allocation0], 20
    %195 = vst.msk [vmem:[%s194] sm:$0x1] %vm193, %v192
    %s196 = scalar_lea.vmem [#allocation0], 51
    %197 = vst.msk [vmem:[%s196] sm:$0x2] %vm193, %v192
    %s198 = scalar_lea.vmem [#allocation0], 82
    %199 = vst.msk [vmem:[%s198] sm:$0x4] %vm193, %v192
    %s200 = scalar_lea.vmem [#allocation0], 113
    %201 = vst.msk [vmem:[%s200] sm:$0x8] %vm193, %v192
    %s202 = scalar_lea.vmem [#allocation0], 144
    %203 = vst.msk [vmem:[%s202] sm:$0x10] %vm193, %v192
    %s204 = scalar_lea.vmem [#allocation0], 175
    %205 = vst.msk [vmem:[%s204] sm:$0x20] %vm193, %v192
    %s206 = scalar_lea.vmem [#allocation0], 206
    %207 = vst.msk [vmem:[%s206] sm:$0x40] %vm193, %v192
    %s208 = scalar_lea.vmem [#allocation0], 237
    %209 = vst.msk [vmem:[%s208] sm:$0x80] %vm193, %v192
    %s210 = scalar_lea.vmem %s0, 88
    %v211 = vld [vmem:[%s210] sm:$0xff]
    %vm212 = vcmask 523264
    %s213 = scalar_lea.vmem [#allocation0], 22
    %214 = vst.msk [vmem:[%s213] sm:$0x1] %vm212, %v211
    %s215 = scalar_lea.vmem [#allocation0], 53
    %216 = vst.msk [vmem:[%s215] sm:$0x2] %vm212, %v211
    %s217 = scalar_lea.vmem [#allocation0], 84
    %218 = vst.msk [vmem:[%s217] sm:$0x4] %vm212, %v211
    %s219 = scalar_lea.vmem [#allocation0], 115
    %220 = vst.msk [vmem:[%s219] sm:$0x8] %vm212, %v211
    %s221 = scalar_lea.vmem [#allocation0], 146
    %222 = vst.msk [vmem:[%s221] sm:$0x10] %vm212, %v211
    %s223 = scalar_lea.vmem [#allocation0], 177
    %224 = vst.msk [vmem:[%s223] sm:$0x20] %vm212, %v211
    %s225 = scalar_lea.vmem [#allocation0], 208
    %226 = vst.msk [vmem:[%s225] sm:$0x40] %vm212, %v211
    %s227 = scalar_lea.vmem [#allocation0], 239
    %228 = vst.msk [vmem:[%s227] sm:$0x80] %vm212, %v211
    %s229 = scalar_lea.vmem %s0, 96
    %v230 = vld [vmem:[%s229] sm:$0xff]
    %vm231 = vcmask 523264
    %s232 = scalar_lea.vmem [#allocation0], 24
    %233 = vst.msk [vmem:[%s232] sm:$0x1] %vm231, %v230
    %s234 = scalar_lea.vmem [#allocation0], 55
    %235 = vst.msk [vmem:[%s234] sm:$0x2] %vm231, %v230
    %s236 = scalar_lea.vmem [#allocation0], 86
    %237 = vst.msk [vmem:[%s236] sm:$0x4] %vm231, %v230
    %s238 = scalar_lea.vmem [#allocation0], 117
    %239 = vst.msk [vmem:[%s238] sm:$0x8] %vm231, %v230
    %s240 = scalar_lea.vmem [#allocation0], 148
    %241 = vst.msk [vmem:[%s240] sm:$0x10] %vm231, %v230
    %s242 = scalar_lea.vmem [#allocation0], 179
    %243 = vst.msk [vmem:[%s242] sm:$0x20] %vm231, %v230
    %s244 = scalar_lea.vmem [#allocation0], 210
    %245 = vst.msk [vmem:[%s244] sm:$0x40] %vm231, %v230
    %s246 = scalar_lea.vmem [#allocation0], 241
    %247 = vst.msk [vmem:[%s246] sm:$0x80] %vm231, %v230
    %s248 = scalar_lea.vmem %s0, 104
    %v249 = vld [vmem:[%s248] sm:$0xff]
    %vm250 = vcmask 523264
    %s251 = scalar_lea.vmem [#allocation0], 26
    %252 = vst.msk [vmem:[%s251] sm:$0x1] %vm250, %v249
    %s253 = scalar_lea.vmem [#allocation0], 57
    %254 = vst.msk [vmem:[%s253] sm:$0x2] %vm250, %v249
    %s255 = scalar_lea.vmem [#allocation0], 88
    %256 = vst.msk [vmem:[%s255] sm:$0x4] %vm250, %v249
    %s257 = scalar_lea.vmem [#allocation0], 119
    %258 = vst.msk [vmem:[%s257] sm:$0x8] %vm250, %v249
    %s259 = scalar_lea.vmem [#allocation0], 150
    %260 = vst.msk [vmem:[%s259] sm:$0x10] %vm250, %v249
    %s261 = scalar_lea.vmem [#allocation0], 181
    %262 = vst.msk [vmem:[%s261] sm:$0x20] %vm250, %v249
    %s263 = scalar_lea.vmem [#allocation0], 212
    %264 = vst.msk [vmem:[%s263] sm:$0x40] %vm250, %v249
    %s265 = scalar_lea.vmem [#allocation0], 243
    %266 = vst.msk [vmem:[%s265] sm:$0x80] %vm250, %v249
    %s267 = scalar_lea.vmem %s0, 112
    %v268 = vld [vmem:[%s267] sm:$0xff]
    %vm269 = vcmask 523264
    %s270 = scalar_lea.vmem [#allocation0], 28
    %271 = vst.msk [vmem:[%s270] sm:$0x1] %vm269, %v268
    %s272 = scalar_lea.vmem [#allocation0], 59
    %273 = vst.msk [vmem:[%s272] sm:$0x2] %vm269, %v268
    %s274 = scalar_lea.vmem [#allocation0], 90
    %275 = vst.msk [vmem:[%s274] sm:$0x4] %vm269, %v268
    %s276 = scalar_lea.vmem [#allocation0], 121
    %277 = vst.msk [vmem:[%s276] sm:$0x8] %vm269, %v268
    %s278 = scalar_lea.vmem [#allocation0], 152
    %279 = vst.msk [vmem:[%s278] sm:$0x10] %vm269, %v268
    %s280 = scalar_lea.vmem [#allocation0], 183
    %281 = vst.msk [vmem:[%s280] sm:$0x20] %vm269, %v268
    %s282 = scalar_lea.vmem [#allocation0], 214
    %283 = vst.msk [vmem:[%s282] sm:$0x40] %vm269, %v268
    %s284 = scalar_lea.vmem [#allocation0], 245
    %285 = vst.msk [vmem:[%s284] sm:$0x80] %vm269, %v268
    %s286 = scalar_lea.vmem %s0, 120
    %v287 = vld [vmem:[%s286] sm:$0xff]
    %vm288 = vcmask 523264
    %s289 = scalar_lea.vmem [#allocation0], 30
    %290 = vst.msk [vmem:[%s289] sm:$0x1] %vm288, %v287
    %s291 = scalar_lea.vmem [#allocation0], 61
    %292 = vst.msk [vmem:[%s291] sm:$0x2] %vm288, %v287
    %s293 = scalar_lea.vmem [#allocation0], 92
    %294 = vst.msk [vmem:[%s293] sm:$0x4] %vm288, %v287
    %s295 = scalar_lea.vmem [#allocation0], 123
    %296 = vst.msk [vmem:[%s295] sm:$0x8] %vm288, %v287
    %s297 = scalar_lea.vmem [#allocation0], 154
    %298 = vst.msk [vmem:[%s297] sm:$0x10] %vm288, %v287
    %s299 = scalar_lea.vmem [#allocation0], 185
    %300 = vst.msk [vmem:[%s299] sm:$0x20] %vm288, %v287
    %s301 = scalar_lea.vmem [#allocation0], 216
    %302 = vst.msk [vmem:[%s301] sm:$0x40] %vm288, %v287
    %s303 = scalar_lea.vmem [#allocation0], 247
    %304 = vst.msk [vmem:[%s303] sm:$0x80] %vm288, %v287
    %v305 = vld [vmem:[%s0] ss:$8 sm:$0xf]
    %v306 = vld [vmem:[%s0] ss:$8 sm:$0xf0]
    %vm307 = vcmask 1047556
    %v308 = vsel %vm307, %v306, %v305
    %309 = vrot.lane.b32.xlu0 %v308, 64
    %v310 = vpop.permute.xlu0 %309
    %vm311 = vcmask 523264
    %s312 = scalar_lea.vmem [#allocation0], 1
    %313 = vst.msk [vmem:[%s312] ss:$2 sm:$0xff] %vm311, %v310
    %s314 = scalar_lea.vmem %s0, 1
    %v315 = vld [vmem:[%s314] ss:$8 sm:$0xf]
    %s316 = scalar_lea.vmem %s0, 1
    %v317 = vld [vmem:[%s316] ss:$8 sm:$0xf0]
    %vm318 = vcmask 1047556
    %v319 = vsel %vm318, %v317, %v315
    %320 = vrot.lane.b32.xlu0 %v319, 64
    %v321 = vpop.permute.xlu0 %320
    %vm322 = vcmask 523264
    %s323 = scalar_lea.vmem [#allocation0], 33
    %324 = vst.msk [vmem:[%s323] ss:$2 sm:$0xff] %vm322, %v321
    %s325 = scalar_lea.vmem %s0, 2
    %v326 = vld [vmem:[%s325] ss:$8 sm:$0xf]
    %s327 = scalar_lea.vmem %s0, 2
    %v328 = vld [vmem:[%s327] ss:$8 sm:$0xf0]
    %vm329 = vcmask 1047556
    %v330 = vsel %vm329, %v328, %v326
    %331 = vrot.lane.b32.xlu0 %v330, 64
    %v332 = vpop.permute.xlu0 %331
    %vm333 = vcmask 523264
    %s334 = scalar_lea.vmem [#allocation0], 65
    %335 = vst.msk [vmem:[%s334] ss:$2 sm:$0xff] %vm333, %v332
    %s336 = scalar_lea.vmem %s0, 3
    %v337 = vld [vmem:[%s336] ss:$8 sm:$0xf]
    %s338 = scalar_lea.vmem %s0, 3
    %v339 = vld [vmem:[%s338] ss:$8 sm:$0xf0]
    %vm340 = vcmask 1047556
    %v341 = vsel %vm340, %v339, %v337
    %342 = vrot.lane.b32.xlu0 %v341, 64
    %v343 = vpop.permute.xlu0 %342
    %vm344 = vcmask 523264
    %s345 = scalar_lea.vmem [#allocation0], 97
    %346 = vst.msk [vmem:[%s345] ss:$2 sm:$0xff] %vm344, %v343
    %s347 = scalar_lea.vmem %s0, 4
    %v348 = vld [vmem:[%s347] ss:$8 sm:$0xf]
    %s349 = scalar_lea.vmem %s0, 4
    %v350 = vld [vmem:[%s349] ss:$8 sm:$0xf0]
    %vm351 = vcmask 1047556
    %v352 = vsel %vm351, %v350, %v348
    %353 = vrot.lane.b32.xlu0 %v352, 64
    %v354 = vpop.permute.xlu0 %353
    %vm355 = vcmask 523264
    %s356 = scalar_lea.vmem [#allocation0], 129
    %357 = vst.msk [vmem:[%s356] ss:$2 sm:$0xff] %vm355, %v354
    %s358 = scalar_lea.vmem %s0, 5
    %v359 = vld [vmem:[%s358] ss:$8 sm:$0xf]
    %s360 = scalar_lea.vmem %s0, 5
    %v361 = vld [vmem:[%s360] ss:$8 sm:$0xf0]
    %vm362 = vcmask 1047556
    %v363 = vsel %vm362, %v361, %v359
    %364 = vrot.lane.b32.xlu0 %v363, 64
    %v365 = vpop.permute.xlu0 %364
    %vm366 = vcmask 523264
    %s367 = scalar_lea.vmem [#allocation0], 161
    %368 = vst.msk [vmem:[%s367] ss:$2 sm:$0xff] %vm366, %v365
    %s369 = scalar_lea.vmem %s0, 6
    %v370 = vld [vmem:[%s369] ss:$8 sm:$0xf]
    %s371 = scalar_lea.vmem %s0, 6
    %v372 = vld [vmem:[%s371] ss:$8 sm:$0xf0]
    %vm373 = vcmask 1047556
    %v374 = vsel %vm373, %v372, %v370
    %375 = vrot.lane.b32.xlu0 %v374, 64
    %v376 = vpop.permute.xlu0 %375
    %vm377 = vcmask 523264
    %s378 = scalar_lea.vmem [#allocation0], 193
    %379 = vst.msk [vmem:[%s378] ss:$2 sm:$0xff] %vm377, %v376
    %s380 = scalar_lea.vmem %s0, 7
    %v381 = vld [vmem:[%s380] ss:$8 sm:$0xf]
    %s382 = scalar_lea.vmem %s0, 7
    %v383 = vld [vmem:[%s382] ss:$8 sm:$0xf0]
    %vm384 = vcmask 1047556
    %v385 = vsel %vm384, %v383, %v381
    %386 = vrot.lane.b32.xlu0 %v385, 64
    %v387 = vpop.permute.xlu0 %386
    %vm388 = vcmask 523264
    %s389 = scalar_lea.vmem [#allocation0], 225
    %390 = vst.msk [vmem:[%s389] ss:$2 sm:$0xff] %vm388, %v387
    %s391 = scalar_lea.vmem %s0, 64
    %v392 = vld [vmem:[%s391] ss:$8 sm:$0xf]
    %s393 = scalar_lea.vmem %s0, 64
    %v394 = vld [vmem:[%s393] ss:$8 sm:$0xf0]
    %vm395 = vcmask 1047556
    %v396 = vsel %vm395, %v394, %v392
    %397 = vrot.lane.b32.xlu0 %v396, 64
    %v398 = vpop.permute.xlu0 %397
    %vm399 = vcmask 523264
    %s400 = scalar_lea.vmem [#allocation0], 17
    %401 = vst.msk [vmem:[%s400] ss:$2 sm:$0xff] %vm399, %v398
    %s402 = scalar_lea.vmem %s0, 65
    %v403 = vld [vmem:[%s402] ss:$8 sm:$0xf]
    %s404 = scalar_lea.vmem %s0, 65
    %v405 = vld [vmem:[%s404] ss:$8 sm:$0xf0]
    %vm406 = vcmask 1047556
    %v407 = vsel %vm406, %v405, %v403
    %408 = vrot.lane.b32.xlu0 %v407, 64
    %v409 = vpop.permute.xlu0 %408
    %vm410 = vcmask 523264
    %s411 = scalar_lea.vmem [#allocation0], 49
    %412 = vst.msk [vmem:[%s411] ss:$2 sm:$0xff] %vm410, %v409
    %s413 = scalar_lea.vmem %s0, 66
    %v414 = vld [vmem:[%s413] ss:$8 sm:$0xf]
    %s415 = scalar_lea.vmem %s0, 66
    %v416 = vld [vmem:[%s415] ss:$8 sm:$0xf0]
    %vm417 = vcmask 1047556
    %v418 = vsel %vm417, %v416, %v414
    %419 = vrot.lane.b32.xlu0 %v418, 64
    %v420 = vpop.permute.xlu0 %419
    %vm421 = vcmask 523264
    %s422 = scalar_lea.vmem [#allocation0], 81
    %423 = vst.msk [vmem:[%s422] ss:$2 sm:$0xff] %vm421, %v420
    %s424 = scalar_lea.vmem %s0, 67
    %v425 = vld [vmem:[%s424] ss:$8 sm:$0xf]
    %s426 = scalar_lea.vmem %s0, 67
    %v427 = vld [vmem:[%s426] ss:$8 sm:$0xf0]
    %vm428 = vcmask 1047556
    %v429 = vsel %vm428, %v427, %v425
    %430 = vrot.lane.b32.xlu0 %v429, 64
    %v431 = vpop.permute.xlu0 %430
    %vm432 = vcmask 523264
    %s433 = scalar_lea.vmem [#allocation0], 113
    %434 = vst.msk [vmem:[%s433] ss:$2 sm:$0xff] %vm432, %v431
    %s435 = scalar_lea.vmem %s0, 68
    %v436 = vld [vmem:[%s435] ss:$8 sm:$0xf]
    %s437 = scalar_lea.vmem %s0, 68
    %v438 = vld [vmem:[%s437] ss:$8 sm:$0xf0]
    %vm439 = vcmask 1047556
    %v440 = vsel %vm439, %v438, %v436
    %441 = vrot.lane.b32.xlu0 %v440, 64
    %v442 = vpop.permute.xlu0 %441
    %vm443 = vcmask 523264
    %s444 = scalar_lea.vmem [#allocation0], 145
    %445 = vst.msk [vmem:[%s444] ss:$2 sm:$0xff] %vm443, %v442
    %s446 = scalar_lea.vmem %s0, 69
    %v447 = vld [vmem:[%s446] ss:$8 sm:$0xf]
    %s448 = scalar_lea.vmem %s0, 69
    %v449 = vld [vmem:[%s448] ss:$8 sm:$0xf0]
    %vm450 = vcmask 1047556
    %v451 = vsel %vm450, %v449, %v447
    %452 = vrot.lane.b32.xlu0 %v451, 64
    %v453 = vpop.permute.xlu0 %452
    %vm454 = vcmask 523264
    %s455 = scalar_lea.vmem [#allocation0], 177
    %456 = vst.msk [vmem:[%s455] ss:$2 sm:$0xff] %vm454, %v453
    %s457 = scalar_lea.vmem %s0, 70
    %v458 = vld [vmem:[%s457] ss:$8 sm:$0xf]
    %s459 = scalar_lea.vmem %s0, 70
    %v460 = vld [vmem:[%s459] ss:$8 sm:$0xf0]
    %vm461 = vcmask 1047556
    %v462 = vsel %vm461, %v460, %v458
    %463 = vrot.lane.b32.xlu0 %v462, 64
    %v464 = vpop.permute.xlu0 %463
    %vm465 = vcmask 523264
    %s466 = scalar_lea.vmem [#allocation0], 209
    %467 = vst.msk [vmem:[%s466] ss:$2 sm:$0xff] %vm465, %v464
    %s468 = scalar_lea.vmem %s0, 71
    %v469 = vld [vmem:[%s468] ss:$8 sm:$0xf]
    %s470 = scalar_lea.vmem %s0, 71
    %v471 = vld [vmem:[%s470] ss:$8 sm:$0xf0]
    %vm472 = vcmask 1047556
    %v473 = vsel %vm472, %v471, %v469
    %474 = vrot.lane.b32.xlu0 %v473, 64
    %v475 = vpop.permute.xlu0 %474
    %vm476 = vcmask 523264
    %s477 = scalar_lea.vmem [#allocation0], 241
    %478 = vst.msk [vmem:[%s477] ss:$2 sm:$0xff] %vm476, %v475
    %480 = vsyncadd [#allocation1], 0
    %s482 = sshll.u32 [#allocation0], 4
    %s483 = int_to_ptr.vmem [resolvable:$true] %s482
    %s484 = sshll.u32 %s1, 4
    %s485 = int_to_ptr.hbm [resolvable:$true] %s484
    %487 = dma.vmem_to_hbm [thread:$0]  %s483, 4096, %s485, [#allocation1]
    %489 = dma.done [#allocation1], 4096
    %490 = vsyncpa [#allocation1], 1

// kernel: fwd.1
$region0: #{fwd.1}
  #allocation0 [shape = 'u32[]', space=smem, size = 0x4, offset = 0x4, fixed_abs, tag = 'smem constant byte address 0x4 - core index']
  #allocation1 [shape = 'u32[72,128]{1,0:T(1,128)}', space=vmem, size = 0x9000, scoped, tag = 'internal scratch']
  %s0 = inlined_call_operand.vmem [shape: f32[4,8,1], index: 0, kind: input, shape index: {}]
  %s1 = inlined_call_operand.vmem [shape: f32[4,1,2048], index: 1, kind: input, shape index: {}]
  %s2 = inlined_call_operand.vmem [shape: f32[4,8,2048], index: 2, kind: input, shape index: {}]
  %s3 = inlined_call_operand.vmem [shape: f32[4,8,2048], index: 3, kind: output, shape index: {0}]
  %s4 = inlined_call_operand.vmem [shape: s32[4,8,128], index: 4, kind: output, shape index: {1}]
  %5 = xla_tuple %s3, %s4
  %s6 = sld [smem:[#allocation0]]
  $region53: #{fwd.1} parent=0
    _
  %s8 = ssub.s32 1, %s6
  %s9 = scalar_select 0, %s8, %s6
  loop: start=0, step=1, limit=6
  $region2: #{fwd.1} parent=0 // loop_pre_header
    _
  $region3: #{fwd.1} parent=0 // loop_header
    %s11 = sphi 0, %s15
    %p12 = scmp.ge.s32.totalorder %s11, 6
    %s21 = sphi 0, %s23
    %s24 = sphi 0, %s21
    %s25 = sphi 0, %s24
    %s41 = sphi 0, %s25
    %s47 = sphi 0, %s49
    %s50 = sphi 0, %s47
    %s51 = sphi 0, %s50
    %s67 = sphi 0, %s51
    %s73 = sphi 0, %s75
    %s76 = sphi 0, %s73
    %s77 = sphi 0, %s76
    %s93 = sphi 0, %s77
    %s99 = sphi 0, %s101
    %s102 = sphi 0, %s99
    %s103 = sphi 0, %s102
    %s119 = sphi 0, %s103
    %s125 = sphi 0, %s127
    %s128 = sphi 0, %s125
    %s129 = sphi 0, %s128
    %s145 = sphi 0, %s129
  $region4: #{fwd.1} parent=0 // loop_header_branch
    %14 = sbr.rel (%p12) target = $region8
  $region5: #{fwd.1} parent=0 // loop_body
    %s16 = ssub.s32 %s11, 1
    %s17 = ssub.s32 %s11, 2
    %s18 = sadd.s32 %s11, 1
    %s19 = ssub.s32 %s11, %s18
    %p20 = scmp.eq.s32.totalorder %s19, 0
    %s22 = sadd.s32 %s21, 1
    %s23 = scalar_select %p20, %s21, %s22
    %p26 = pneg %p20
    %p27 = scmp.eq.s32.totalorder %s11, 3
    %p28 = por %p26, %p27
    %p29 = scmp.ne.s32.totalorder %s21, %s24
    %p30 = scmp.eq.s32.totalorder %s11, 0
    %p31 = por %p29, %p30
    %p32 = scmp.ne.s32.totalorder %s21, %s24
    %p33 = scmp.eq.s32.totalorder %s16, 3
    %p34 = por %p32, %p33
    %p35 = scmp.ne.s32.totalorder %s24, %s25
    %p36 = scmp.eq.s32.totalorder %s16, 0
    %p37 = por %p35, %p36
    %p38 = scmp.ne.s32.totalorder %s24, %s25
    %p39 = scmp.eq.s32.totalorder %s17, 3
    %p40 = por %p38, %p39
    %p42 = scmp.ne.s32.totalorder %s25, %s41
    %p43 = scmp.eq.s32.totalorder %s17, 0
    %p44 = por %p42, %p43
    %s45 = ssub.s32 %s11, %s18
    %p46 = scmp.eq.s32.totalorder %s45, 0
    %s48 = sadd.s32 %s47, 1
    %s49 = scalar_select %p46, %s47, %s48
    %p52 = pneg %p46
    %p53 = scmp.eq.s32.totalorder %s11, 3
    %p54 = por %p52, %p53
    %p55 = scmp.ne.s32.totalorder %s47, %s50
    %p56 = scmp.eq.s32.totalorder %s11, 0
    %p57 = por %p55, %p56
    %p58 = scmp.ne.s32.totalorder %s47, %s50
    %p59 = scmp.eq.s32.totalorder %s16, 3
    %p60 = por %p58, %p59
    %p61 = scmp.ne.s32.totalorder %s50, %s51
    %p62 = scmp.eq.s32.totalorder %s16, 0
    %p63 = por %p61, %p62
    %p64 = scmp.ne.s32.totalorder %s50, %s51
    %p65 = scmp.eq.s32.totalorder %s17, 3
    %p66 = por %p64, %p65
    %p68 = scmp.ne.s32.totalorder %s51, %s67
    %p69 = scmp.eq.s32.totalorder %s17, 0
    %p70 = por %p68, %p69
    %s71 = ssub.s32 %s11, %s18
    %p72 = scmp.eq.s32.totalorder %s71, 0
    %s74 = sadd.s32 %s73, 1
    %s75 = scalar_select %p72, %s73, %s74
    %p78 = pneg %p72
    %p79 = scmp.eq.s32.totalorder %s11, 3
    %p80 = por %p78, %p79
    %p81 = scmp.ne.s32.totalorder %s73, %s76
    %p82 = scmp.eq.s32.totalorder %s11, 0
    %p83 = por %p81, %p82
    %p84 = scmp.ne.s32.totalorder %s73, %s76
    %p85 = scmp.eq.s32.totalorder %s16, 3
    %p86 = por %p84, %p85
    %p87 = scmp.ne.s32.totalorder %s76, %s77
    %p88 = scmp.eq.s32.totalorder %s16, 0
    %p89 = por %p87, %p88
    %p90 = scmp.ne.s32.totalorder %s76, %s77
    %p91 = scmp.eq.s32.totalorder %s17, 3
    %p92 = por %p90, %p91
    %p94 = scmp.ne.s32.totalorder %s77, %s93
    %p95 = scmp.eq.s32.totalorder %s17, 0
    %p96 = por %p94, %p95
    %s97 = ssub.s32 %s11, %s18
    %p98 = scmp.eq.s32.totalorder %s97, 0
    %s100 = sadd.s32 %s99, 1
    %s101 = scalar_select %p98, %s99, %s100
    %p104 = pneg %p98
    %p105 = scmp.eq.s32.totalorder %s11, 3
    %p106 = por %p104, %p105
    %p107 = scmp.ne.s32.totalorder %s99, %s102
    %p108 = scmp.eq.s32.totalorder %s11, 0
    %p109 = por %p107, %p108
    %p110 = scmp.ne.s32.totalorder %s99, %s102
    %p111 = scmp.eq.s32.totalorder %s16, 3
    %p112 = por %p110, %p111
    %p113 = scmp.ne.s32.totalorder %s102, %s103
    %p114 = scmp.eq.s32.totalorder %s16, 0
    %p115 = por %p113, %p114
    %p116 = scmp.ne.s32.totalorder %s102, %s103
    %p117 = scmp.eq.s32.totalorder %s17, 3
    %p118 = por %p116, %p117
    %p120 = scmp.ne.s32.totalorder %s103, %s119
    %p121 = scmp.eq.s32.totalorder %s17, 0
    %p122 = por %p120, %p121
    %s123 = ssub.s32 %s11, %s18
    %p124 = scmp.eq.s32.totalorder %s123, 0
    %s126 = sadd.s32 %s125, 1
    %s127 = scalar_select %p124, %s125, %s126
    %p130 = pneg %p124
    %p131 = scmp.eq.s32.totalorder %s11, 3
    %p132 = por %p130, %p131
    %p133 = scmp.ne.s32.totalorder %s125, %s128
    %p134 = scmp.eq.s32.totalorder %s11, 0
    %p135 = por %p133, %p134
    %p136 = scmp.ne.s32.totalorder %s125, %s128
    %p137 = scmp.eq.s32.totalorder %s16, 3
    %p138 = por %p136, %p137
    %p139 = scmp.ne.s32.totalorder %s128, %s129
    %p140 = scmp.eq.s32.totalorder %s16, 0
    %p141 = por %p139, %p140
    %p142 = scmp.ne.s32.totalorder %s128, %s129
    %p143 = scmp.eq.s32.totalorder %s17, 3
    %p144 = por %p142, %p143
    %p146 = scmp.ne.s32.totalorder %s129, %s145
    %p147 = scmp.eq.s32.totalorder %s17, 0
    %p148 = por %p146, %p147
    %p149 = scmp.le.s32.totalorder 1, %s11
    %p150 = scmp.lt.s32.totalorder %s11, 5
    %p151 = pnand %p149, %p150
    %p152 = pneg %p151
    // Predicated region
    $region9: #{fwd.1} parent=5 // pred_check
      _
    $region10: #{fwd.1} parent=5 // pred_check_branch
      %154 = sbr.rel (%p151) target = $region12
    $region11: #{fwd.1} parent=5 // pred_region
      %s155 = ssub.s32 %s11, 1
    $region12: #{fwd.1} parent=5 // pred_fallthru
      _
    %p156 = scmp.lt.s32.totalorder %s11, 4
    // Predicated region
    $region13: #{fwd.1} parent=5 // pred_check
      %p157 = pneg %p156
    $region14: #{fwd.1} parent=5 // pred_check_branch
      %159 = sbr.rel (%p157) target = $region16
    $region15: #{fwd.1} parent=5 // pred_region
      // Predicated region
      $region17: #{fwd.1} parent=15 // pred_check
        %p160 = pneg %p31
      $region18: #{fwd.1} parent=15 // pred_check_branch
        %162 = sbr.rel (%p160) target = $region20
      $region19: #{fwd.1} parent=15 // pred_region
        %p163 = scmp.lt.s32.totalorder %s11, 3
        %s164 = scalar_select %p163, %s11, 3
        %s165 = smul.addr %s164, 8
        %s166 = scalar_lea.vmem %s0, %s165
      $region20: #{fwd.1} parent=15 // pred_fallthru
        _
      // Predicated region
      $region21: #{fwd.1} parent=15 // pred_check
        %p167 = pneg %p57
      $region22: #{fwd.1} parent=15 // pred_check_branch
        %169 = sbr.rel (%p167) target = $region24
      $region23: #{fwd.1} parent=15 // pred_region
        %p170 = scmp.lt.s32.totalorder %s11, 3
        %s171 = scalar_select %p170, %s11, 3
        %s172 = smul.addr %s171, 16
        %s173 = scalar_lea.vmem %s1, %s172
      $region24: #{fwd.1} parent=15 // pred_fallthru
        _
      // Predicated region
      $region25: #{fwd.1} parent=15 // pred_check
        %p174 = pneg %p83
      $region26: #{fwd.1} parent=15 // pred_check_branch
        %176 = sbr.rel (%p174) target = $region28
      $region27: #{fwd.1} parent=15 // pred_region
        %p177 = scmp.lt.s32.totalorder %s11, 3
        %s178 = scalar_select %p177, %s11, 3
        %s179 = smul.addr %s178, 16
        %s180 = smul.addr %s179, 8
        %s181 = scalar_lea.vmem %s2, %s180
      $region28: #{fwd.1} parent=15 // pred_fallthru
        _
    $region16: #{fwd.1} parent=5 // pred_fallthru
      _
    %p182 = scmp.le.s32.totalorder 1, %s11
    %p183 = scmp.lt.s32.totalorder %s11, 5
    %p184 = pnand %p182, %p183
    %p185 = pneg %p184
    // Predicated region
    $region29: #{fwd.1} parent=5 // pred_check
      _
    $region30: #{fwd.1} parent=5 // pred_check_branch
      %187 = sbr.rel (%p184) target = $region32
    $region31: #{fwd.1} parent=5 // pred_region
      %s188 = ssub.s32 %s11, 1
      %p189 = scmp.lt.s32.totalorder %s16, 3
      %s190 = scalar_select %p189, %s16, 3
      %s191 = smul.addr %s190, 8
      %s192 = scalar_lea.vmem %s0, %s191
      %p193 = pneg %p37
      %p194 = pneg %p34
      %p195 = scmp.lt.s32.totalorder %s16, 3
      %s196 = scalar_select %p195, %s16, 3
      %s197 = smul.addr %s196, 16
      %s198 = scalar_lea.vmem %s1, %s197
      %p199 = pneg %p63
      %p200 = pneg %p60
      %p201 = scmp.lt.s32.totalorder %s16, 3
      %s202 = scalar_select %p201, %s16, 3
      %s203 = smul.addr %s202, 16
      %s204 = smul.addr %s203, 8
      %s205 = scalar_lea.vmem %s2, %s204
      %p206 = pneg %p89
      %p207 = pneg %p86
      %p208 = pneg %p115
      %p209 = pneg %p112
      %p210 = scmp.lt.s32.totalorder %s16, 3
      %s211 = scalar_select %p210, %s16, 3
      %s212 = smul.addr %s211, 16
      %s213 = smul.addr %s212, 8
      %s214 = scalar_lea.vmem %s3, %s213
      %p215 = pneg %p141
      %p216 = pneg %p138
      %p217 = scmp.lt.s32.totalorder %s16, 3
      %s218 = scalar_select %p217, %s16, 3
      %s219 = smul.addr %s218, 8
      %s220 = scalar_lea.vmem %s4, %s219
      %p221 = scmp.lt.s32.totalorder %s16, 3
      %s222 = scalar_select %p221, %s16, 3
      %s223 = smul.addr %s222, 8
      %s224 = scalar_lea.vmem %s0, %s223
      %p225 = scmp.lt.s32.totalorder %s16, 3
      %s226 = scalar_select %p225, %s16, 3
      %s227 = smul.addr %s226, 16
      %s228 = scalar_lea.vmem %s1, %s227
      %p229 = scmp.lt.s32.totalorder %s16, 3
      %s230 = scalar_select %p229, %s16, 3
      %s231 = smul.addr %s230, 16
      %s232 = smul.addr %s231, 8
      %s233 = scalar_lea.vmem %s2, %s232
      %p234 = scmp.lt.s32.totalorder %s16, 3
      %s235 = scalar_select %p234, %s16, 3
      %s236 = smul.addr %s235, 16
      %s237 = smul.addr %s236, 8
      %s238 = scalar_lea.vmem %s3, %s237
      %p239 = scmp.lt.s32.totalorder %s16, 3
      %s240 = scalar_select %p239, %s16, 3
      %s241 = smul.addr %s240, 8
      %s242 = scalar_lea.vmem %s4, %s241
      %v243 = vld [vmem:[%s224] sm:$0xff]
      %v244 = vld [vmem:[%s228] sm:$0xff]
      %v245 = vld [vmem:[%s228 + $0x8] sm:$0xff]
      %v246 = vld [vmem:[%s233] sm:$0xff]
      %v247 = vld [vmem:[%s233 + $0x8] sm:$0xff]
      %v248 = vld [vmem:[%s233 + $0x10] sm:$0xff]
      %v249 = vld [vmem:[%s233 + $0x18] sm:$0xff]
      %v250 = vld [vmem:[%s233 + $0x20] sm:$0xff]
      %v251 = vld [vmem:[%s233 + $0x28] sm:$0xff]
      %v252 = vld [vmem:[%s233 + $0x30] sm:$0xff]
      %v253 = vld [vmem:[%s233 + $0x38] sm:$0xff]
      %v254 = vld [vmem:[%s233 + $0x40] sm:$0xff]
      %v255 = vld [vmem:[%s233 + $0x48] sm:$0xff]
      %v256 = vld [vmem:[%s233 + $0x50] sm:$0xff]
      %v257 = vld [vmem:[%s233 + $0x58] sm:$0xff]
      %v258 = vld [vmem:[%s233 + $0x60] sm:$0xff]
      %v259 = vld [vmem:[%s233 + $0x68] sm:$0xff]
      %v260 = vld [vmem:[%s233 + $0x70] sm:$0xff]
      %v261 = vld [vmem:[%s233 + $0x78] sm:$0xff]
      %v262 = vlog2.pop %v243
      %v263 = vmul.f32 %v262, 0.6931472
      %v264 = vsub.f32 1.0, %v243
      %v265 = vlog2.pop %v264
      %v266 = vmul.f32 %v265, 0.6931472
      %v267 = vsub.f32 %v263, %v266
      %269 = vset.pattern.permute.xlu0 0
      %270 = vperm.xlu0 %269, %v267
      %v271 = vpop.permute.xlu0 %270
      %v275 = vperm.slane %v244, 0
      %v276 = vperm.slane %v244, 1
      %v277 = vperm.slane %v244, 2
      %v278 = vperm.slane %v244, 3
      %v279 = vperm.slane %v244, 4
      %v280 = vperm.slane %v244, 5
      %v281 = vperm.slane %v244, 6
      %v282 = vperm.slane %v244, 7
      %v283 = vperm.slane %v245, 0
      %v284 = vperm.slane %v245, 1
      %v285 = vperm.slane %v245, 2
      %v286 = vperm.slane %v245, 3
      %v287 = vperm.slane %v245, 4
      %v288 = vperm.slane %v245, 5
      %v289 = vperm.slane %v245, 6
      %v290 = vperm.slane %v245, 7
      %v307 = vadd.f32 %v271, %v275
      %v308 = vadd.f32 %v271, %v276
      %v309 = vadd.f32 %v271, %v277
      %v310 = vadd.f32 %v271, %v278
      %v311 = vadd.f32 %v271, %v279
      %v312 = vadd.f32 %v271, %v280
      %v313 = vadd.f32 %v271, %v281
      %v314 = vadd.f32 %v271, %v282
      %v315 = vadd.f32 %v271, %v283
      %v316 = vadd.f32 %v271, %v284
      %v317 = vadd.f32 %v271, %v285
      %v318 = vadd.f32 %v271, %v286
      %v319 = vadd.f32 %v271, %v287
      %v320 = vadd.f32 %v271, %v288
      %v321 = vadd.f32 %v271, %v289
      %v322 = vadd.f32 %v271, %v290
      %v323 = vlog2.pop %v246
      %v324 = vmul.f32 %v323, 0.6931472
      %v325 = vlog2.pop %v247
      %v326 = vmul.f32 %v325, 0.6931472
      %v327 = vlog2.pop %v248
      %v328 = vmul.f32 %v327, 0.6931472
      %v329 = vlog2.pop %v249
      %v330 = vmul.f32 %v329, 0.6931472
      %v331 = vlog2.pop %v250
      %v332 = vmul.f32 %v331, 0.6931472
      %v333 = vlog2.pop %v251
      %v334 = vmul.f32 %v333, 0.6931472
      %v335 = vlog2.pop %v252
      %v336 = vmul.f32 %v335, 0.6931472
      %v337 = vlog2.pop %v253
      %v338 = vmul.f32 %v337, 0.6931472
      %v339 = vlog2.pop %v254
      %v340 = vmul.f32 %v339, 0.6931472
      %v341 = vlog2.pop %v255
      %v342 = vmul.f32 %v341, 0.6931472
      %v343 = vlog2.pop %v256
      %v344 = vmul.f32 %v343, 0.6931472
      %v345 = vlog2.pop %v257
      %v346 = vmul.f32 %v345, 0.6931472
      %v347 = vlog2.pop %v258
      %v348 = vmul.f32 %v347, 0.6931472
      %v349 = vlog2.pop %v259
      %v350 = vmul.f32 %v349, 0.6931472
      %v351 = vlog2.pop %v260
      %v352 = vmul.f32 %v351, 0.6931472
      %v353 = vlog2.pop %v261
      %v354 = vmul.f32 %v353, 0.6931472
      %v355 = vsub.f32 1.0, %v246
      %v356 = vsub.f32 1.0, %v247
      %v357 = vsub.f32 1.0, %v248
      %v358 = vsub.f32 1.0, %v249
      %v359 = vsub.f32 1.0, %v250
      %v360 = vsub.f32 1.0, %v251
      %v361 = vsub.f32 1.0, %v252
      %v362 = vsub.f32 1.0, %v253
      %v363 = vsub.f32 1.0, %v254
      %v364 = vsub.f32 1.0, %v255
      %v365 = vsub.f32 1.0, %v256
      %v366 = vsub.f32 1.0, %v257
      %v367 = vsub.f32 1.0, %v258
      %v368 = vsub.f32 1.0, %v259
      %v369 = vsub.f32 1.0, %v260
      %v370 = vsub.f32 1.0, %v261
      %v371 = vlog2.pop %v355
      %v372 = vmul.f32 %v371, 0.6931472
      %v373 = vlog2.pop %v356
      %v374 = vmul.f32 %v373, 0.6931472
      %v375 = vlog2.pop %v357
      %v376 = vmul.f32 %v375, 0.6931472
      %v377 = vlog2.pop %v358
      %v378 = vmul.f32 %v377, 0.6931472
      %v379 = vlog2.pop %v359
      %v380 = vmul.f32 %v379, 0.6931472
      %v381 = vlog2.pop %v360
      %v382 = vmul.f32 %v381, 0.6931472
      %v383 = vlog2.pop %v361
      %v384 = vmul.f32 %v383, 0.6931472
      %v385 = vlog2.pop %v362
      %v386 = vmul.f32 %v385, 0.6931472
      %v387 = vlog2.pop %v363
      %v388 = vmul.f32 %v387, 0.6931472
      %v389 = vlog2.pop %v364
      %v390 = vmul.f32 %v389, 0.6931472
      %v391 = vlog2.pop %v365
      %v392 = vmul.f32 %v391, 0.6931472
      %v393 = vlog2.pop %v366
      %v394 = vmul.f32 %v393, 0.6931472
      %v395 = vlog2.pop %v367
      %v396 = vmul.f32 %v395, 0.6931472
      %v397 = vlog2.pop %v368
      %v398 = vmul.f32 %v397, 0.6931472
      %v399 = vlog2.pop %v369
      %v400 = vmul.f32 %v399, 0.6931472
      %v401 = vlog2.pop %v370
      %v402 = vmul.f32 %v401, 0.6931472
      %v403 = vsub.f32 %v324, %v372
      %v404 = vsub.f32 %v326, %v374
      %v405 = vsub.f32 %v328, %v376
      %v406 = vsub.f32 %v330, %v378
      %v407 = vsub.f32 %v332, %v380
      %v408 = vsub.f32 %v334, %v382
      %v409 = vsub.f32 %v336, %v384
      %v410 = vsub.f32 %v338, %v386
      %v411 = vsub.f32 %v340, %v388
      %v412 = vsub.f32 %v342, %v390
      %v413 = vsub.f32 %v344, %v392
      %v414 = vsub.f32 %v346, %v394
      %v415 = vsub.f32 %v348, %v396
      %v416 = vsub.f32 %v350, %v398
      %v417 = vsub.f32 %v352, %v400
      %v418 = vsub.f32 %v354, %v402
      %v419 = vadd.f32 %v307, %v403
      %v420 = vadd.f32 %v308, %v404
      %v421 = vadd.f32 %v309, %v405
      %v422 = vadd.f32 %v310, %v406
      %v423 = vadd.f32 %v311, %v407
      %v424 = vadd.f32 %v312, %v408
      %v425 = vadd.f32 %v313, %v409
      %v426 = vadd.f32 %v314, %v410
      %v427 = vadd.f32 %v315, %v411
      %v428 = vadd.f32 %v316, %v412
      %v429 = vadd.f32 %v317, %v413
      %v430 = vadd.f32 %v318, %v414
      %v431 = vadd.f32 %v319, %v415
      %v432 = vadd.f32 %v320, %v416
      %v433 = vadd.f32 %v321, %v417
      %v434 = vadd.f32 %v322, %v418
      %v435 = vsub.f32 0.0, %v419
      %v436 = vsub.f32 0.0, %v420
      %v437 = vsub.f32 0.0, %v421
      %v438 = vsub.f32 0.0, %v422
      %v439 = vsub.f32 0.0, %v423
      %v440 = vsub.f32 0.0, %v424
      %v441 = vsub.f32 0.0, %v425
      %v442 = vsub.f32 0.0, %v426
      %v443 = vsub.f32 0.0, %v427
      %v444 = vsub.f32 0.0, %v428
      %v445 = vsub.f32 0.0, %v429
      %v446 = vsub.f32 0.0, %v430
      %v447 = vsub.f32 0.0, %v431
      %v448 = vsub.f32 0.0, %v432
      %v449 = vsub.f32 0.0, %v433
      %v450 = vsub.f32 0.0, %v434
      %v451 = vmul.f32 %v435, 1.4925373
      %v452 = vmul.f32 %v436, 1.4925373
      %v453 = vmul.f32 %v437, 1.4925373
      %v454 = vmul.f32 %v438, 1.4925373
      %v455 = vmul.f32 %v439, 1.4925373
      %v456 = vmul.f32 %v440, 1.4925373
      %v457 = vmul.f32 %v441, 1.4925373
      %v458 = vmul.f32 %v442, 1.4925373
      %v459 = vmul.f32 %v443, 1.4925373
      %v460 = vmul.f32 %v444, 1.4925373
      %v461 = vmul.f32 %v445, 1.4925373
      %v462 = vmul.f32 %v446, 1.4925373
      %v463 = vmul.f32 %v447, 1.4925373
      %v464 = vmul.f32 %v448, 1.4925373
      %v465 = vmul.f32 %v449, 1.4925373
      %v466 = vmul.f32 %v450, 1.4925373
      %v467 = vmul.f32 %v451, 1.442695
      %v468 = vpow.pop %v467
      %v469 = vmul.f32 %v452, 1.442695
      %v470 = vpow.pop %v469
      %v471 = vmul.f32 %v453, 1.442695
      %v472 = vpow.pop %v471
      %v473 = vmul.f32 %v454, 1.442695
      %v474 = vpow.pop %v473
      %v475 = vmul.f32 %v455, 1.442695
      %v476 = vpow.pop %v475
      %v477 = vmul.f32 %v456, 1.442695
      %v478 = vpow.pop %v477
      %v479 = vmul.f32 %v457, 1.442695
      %v480 = vpow.pop %v479
      %v481 = vmul.f32 %v458, 1.442695
      %v482 = vpow.pop %v481
      %v483 = vmul.f32 %v459, 1.442695
      %v484 = vpow.pop %v483
      %v485 = vmul.f32 %v460, 1.442695
      %v486 = vpow.pop %v485
      %v487 = vmul.f32 %v461, 1.442695
      %v488 = vpow.pop %v487
      %v489 = vmul.f32 %v462, 1.442695
      %v490 = vpow.pop %v489
      %v491 = vmul.f32 %v463, 1.442695
      %v492 = vpow.pop %v491
      %v493 = vmul.f32 %v464, 1.442695
      %v494 = vpow.pop %v493
      %v495 = vmul.f32 %v465, 1.442695
      %v496 = vpow.pop %v495
      %v497 = vmul.f32 %v466, 1.442695
      %v498 = vpow.pop %v497
      %v499 = vadd.f32 %v468, 1.0
      %v500 = vadd.f32 %v470, 1.0
      %v501 = vadd.f32 %v472, 1.0
      %v502 = vadd.f32 %v474, 1.0
      %v503 = vadd.f32 %v476, 1.0
      %v504 = vadd.f32 %v478, 1.0
      %v505 = vadd.f32 %v480, 1.0
      %v506 = vadd.f32 %v482, 1.0
      %v507 = vadd.f32 %v484, 1.0
      %v508 = vadd.f32 %v486, 1.0
      %v509 = vadd.f32 %v488, 1.0
      %v510 = vadd.f32 %v490, 1.0
      %v511 = vadd.f32 %v492, 1.0
      %v512 = vadd.f32 %v494, 1.0
      %v513 = vadd.f32 %v496, 1.0
      %v514 = vadd.f32 %v498, 1.0
      %v515 = vrcp.pop %v499
      %v516 = vmul.f32 %v499, %v515
      %v517 = vsub.f32 1.0, %v516
      %v518 = vmul.f32 %v515, %v517
      %v519 = vadd.f32 %v515, %v518
      %vm520 = vweird.f32 %v499
      %vm521 = vweird.f32 %v515
      %vm522 = vmor %vm520, %vm521
      %v523 = vsel %vm522, %v515, %v519
      %v524 = vand.u32 2147483647, %v499
      %vm525 = vcmp.eq.f32.partialorder %v524, 8.507059e+37
      %v526 = vand.u32 %v499, 2147483648
      %v527 = vor.u32 1.1754944e-38, %v526
      %v528 = vsel %vm525, %v527, %v523
      %v529 = vmul.f32 1.0, %v528
      %v530 = vrcp.pop %v500
      %v531 = vmul.f32 %v500, %v530
      %v532 = vsub.f32 1.0, %v531
      %v533 = vmul.f32 %v530, %v532
      %v534 = vadd.f32 %v530, %v533
      %vm535 = vweird.f32 %v500
      %vm536 = vweird.f32 %v530
      %vm537 = vmor %vm535, %vm536
      %v538 = vsel %vm537, %v530, %v534
      %v539 = vand.u32 2147483647, %v500
      %vm540 = vcmp.eq.f32.partialorder %v539, 8.507059e+37
      %v541 = vand.u32 %v500, 2147483648
      %v542 = vor.u32 1.1754944e-38, %v541
      %v543 = vsel %vm540, %v542, %v538
      %v544 = vmul.f32 1.0, %v543
      %v545 = vrcp.pop %v501
      %v546 = vmul.f32 %v501, %v545
      %v547 = vsub.f32 1.0, %v546
      %v548 = vmul.f32 %v545, %v547
      %v549 = vadd.f32 %v545, %v548
      %vm550 = vweird.f32 %v501
      %vm551 = vweird.f32 %v545
      %vm552 = vmor %vm550, %vm551
      %v553 = vsel %vm552, %v545, %v549
      %v554 = vand.u32 2147483647, %v501
      %vm555 = vcmp.eq.f32.partialorder %v554, 8.507059e+37
      %v556 = vand.u32 %v501, 2147483648
      %v557 = vor.u32 1.1754944e-38, %v556
      %v558 = vsel %vm555, %v557, %v553
      %v559 = vmul.f32 1.0, %v558
      %v560 = vrcp.pop %v502
      %v561 = vmul.f32 %v502, %v560
      %v562 = vsub.f32 1.0, %v561
      %v563 = vmul.f32 %v560, %v562
      %v564 = vadd.f32 %v560, %v563
      %vm565 = vweird.f32 %v502
      %vm566 = vweird.f32 %v560
      %vm567 = vmor %vm565, %vm566
      %v568 = vsel %vm567, %v560, %v564
      %v569 = vand.u32 2147483647, %v502
      %vm570 = vcmp.eq.f32.partialorder %v569, 8.507059e+37
      %v571 = vand.u32 %v502, 2147483648
      %v572 = vor.u32 1.1754944e-38, %v571
      %v573 = vsel %vm570, %v572, %v568
      %v574 = vmul.f32 1.0, %v573
      %v575 = vrcp.pop %v503
      %v576 = vmul.f32 %v503, %v575
      %v577 = vsub.f32 1.0, %v576
      %v578 = vmul.f32 %v575, %v577
      %v579 = vadd.f32 %v575, %v578
      %vm580 = vweird.f32 %v503
      %vm581 = vweird.f32 %v575
      %vm582 = vmor %vm580, %vm581
      %v583 = vsel %vm582, %v575, %v579
      %v584 = vand.u32 2147483647, %v503
      %vm585 = vcmp.eq.f32.partialorder %v584, 8.507059e+37
      %v586 = vand.u32 %v503, 2147483648
      %v587 = vor.u32 1.1754944e-38, %v586
      %v588 = vsel %vm585, %v587, %v583
      %v589 = vmul.f32 1.0, %v588
      %v590 = vrcp.pop %v504
      %v591 = vmul.f32 %v504, %v590
      %v592 = vsub.f32 1.0, %v591
      %v593 = vmul.f32 %v590, %v592
      %v594 = vadd.f32 %v590, %v593
      %vm595 = vweird.f32 %v504
      %vm596 = vweird.f32 %v590
      %vm597 = vmor %vm595, %vm596
      %v598 = vsel %vm597, %v590, %v594
      %v599 = vand.u32 2147483647, %v504
      %vm600 = vcmp.eq.f32.partialorder %v599, 8.507059e+37
      %v601 = vand.u32 %v504, 2147483648
      %v602 = vor.u32 1.1754944e-38, %v601
      %v603 = vsel %vm600, %v602, %v598
      %v604 = vmul.f32 1.0, %v603
      %v605 = vrcp.pop %v505
      %v606 = vmul.f32 %v505, %v605
      %v607 = vsub.f32 1.0, %v606
      %v608 = vmul.f32 %v605, %v607
      %v609 = vadd.f32 %v605, %v608
      %vm610 = vweird.f32 %v505
      %vm611 = vweird.f32 %v605
      %vm612 = vmor %vm610, %vm611
      %v613 = vsel %vm612, %v605, %v609
      %v614 = vand.u32 2147483647, %v505
      %vm615 = vcmp.eq.f32.partialorder %v614, 8.507059e+37
      %v616 = vand.u32 %v505, 2147483648
      %v617 = vor.u32 1.1754944e-38, %v616
      %v618 = vsel %vm615, %v617, %v613
      %v619 = vmul.f32 1.0, %v618
      %v620 = vrcp.pop %v506
      %v621 = vmul.f32 %v506, %v620
      %v622 = vsub.f32 1.0, %v621
      %v623 = vmul.f32 %v620, %v622
      %v624 = vadd.f32 %v620, %v623
      %vm625 = vweird.f32 %v506
      %vm626 = vweird.f32 %v620
      %vm627 = vmor %vm625, %vm626
      %v628 = vsel %vm627, %v620, %v624
      %v629 = vand.u32 2147483647, %v506
      %vm630 = vcmp.eq.f32.partialorder %v629, 8.507059e+37
      %v631 = vand.u32 %v506, 2147483648
      %v632 = vor.u32 1.1754944e-38, %v631
      %v633 = vsel %vm630, %v632, %v628
      %v634 = vmul.f32 1.0, %v633
      %v635 = vrcp.pop %v507
      %v636 = vmul.f32 %v507, %v635
      %v637 = vsub.f32 1.0, %v636
      %v638 = vmul.f32 %v635, %v637
      %v639 = vadd.f32 %v635, %v638
      %vm640 = vweird.f32 %v507
      %vm641 = vweird.f32 %v635
      %vm642 = vmor %vm640, %vm641
      %v643 = vsel %vm642, %v635, %v639
      %v644 = vand.u32 2147483647, %v507
      %vm645 = vcmp.eq.f32.partialorder %v644, 8.507059e+37
      %v646 = vand.u32 %v507, 2147483648
      %v647 = vor.u32 1.1754944e-38, %v646
      %v648 = vsel %vm645, %v647, %v643
      %v649 = vmul.f32 1.0, %v648
      %v650 = vrcp.pop %v508
      %v651 = vmul.f32 %v508, %v650
      %v652 = vsub.f32 1.0, %v651
      %v653 = vmul.f32 %v650, %v652
      %v654 = vadd.f32 %v650, %v653
      %vm655 = vweird.f32 %v508
      %vm656 = vweird.f32 %v650
      %vm657 = vmor %vm655, %vm656
      %v658 = vsel %vm657, %v650, %v654
      %v659 = vand.u32 2147483647, %v508
      %vm660 = vcmp.eq.f32.partialorder %v659, 8.507059e+37
      %v661 = vand.u32 %v508, 2147483648
      %v662 = vor.u32 1.1754944e-38, %v661
      %v663 = vsel %vm660, %v662, %v658
      %v664 = vmul.f32 1.0, %v663
      %v665 = vrcp.pop %v509
      %v666 = vmul.f32 %v509, %v665
      %v667 = vsub.f32 1.0, %v666
      %v668 = vmul.f32 %v665, %v667
      %v669 = vadd.f32 %v665, %v668
      %vm670 = vweird.f32 %v509
      %vm671 = vweird.f32 %v665
      %vm672 = vmor %vm670, %vm671
      %v673 = vsel %vm672, %v665, %v669
      %v674 = vand.u32 2147483647, %v509
      %vm675 = vcmp.eq.f32.partialorder %v674, 8.507059e+37
      %v676 = vand.u32 %v509, 2147483648
      %v677 = vor.u32 1.1754944e-38, %v676
      %v678 = vsel %vm675, %v677, %v673
      %v679 = vmul.f32 1.0, %v678
      %v680 = vrcp.pop %v510
      %v681 = vmul.f32 %v510, %v680
      %v682 = vsub.f32 1.0, %v681
      %v683 = vmul.f32 %v680, %v682
      %v684 = vadd.f32 %v680, %v683
      %vm685 = vweird.f32 %v510
      %vm686 = vweird.f32 %v680
      %vm687 = vmor %vm685, %vm686
      %v688 = vsel %vm687, %v680, %v684
      %v689 = vand.u32 2147483647, %v510
      %vm690 = vcmp.eq.f32.partialorder %v689, 8.507059e+37
      %v691 = vand.u32 %v510, 2147483648
      %v692 = vor.u32 1.1754944e-38, %v691
      %v693 = vsel %vm690, %v692, %v688
      %v694 = vmul.f32 1.0, %v693
      %v695 = vrcp.pop %v511
      %v696 = vmul.f32 %v511, %v695
      %v697 = vsub.f32 1.0, %v696
      %v698 = vmul.f32 %v695, %v697
      %v699 = vadd.f32 %v695, %v698
      %vm700 = vweird.f32 %v511
      %vm701 = vweird.f32 %v695
      %vm702 = vmor %vm700, %vm701
      %v703 = vsel %vm702, %v695, %v699
      %v704 = vand.u32 2147483647, %v511
      %vm705 = vcmp.eq.f32.partialorder %v704, 8.507059e+37
      %v706 = vand.u32 %v511, 2147483648
      %v707 = vor.u32 1.1754944e-38, %v706
      %v708 = vsel %vm705, %v707, %v703
      %v709 = vmul.f32 1.0, %v708
      %v710 = vrcp.pop %v512
      %v711 = vmul.f32 %v512, %v710
      %v712 = vsub.f32 1.0, %v711
      %v713 = vmul.f32 %v710, %v712
      %v714 = vadd.f32 %v710, %v713
      %vm715 = vweird.f32 %v512
      %vm716 = vweird.f32 %v710
      %vm717 = vmor %vm715, %vm716
      %v718 = vsel %vm717, %v710, %v714
      %v719 = vand.u32 2147483647, %v512
      %vm720 = vcmp.eq.f32.partialorder %v719, 8.507059e+37
      %v721 = vand.u32 %v512, 2147483648
      %v722 = vor.u32 1.1754944e-38, %v721
      %v723 = vsel %vm720, %v722, %v718
      %v724 = vmul.f32 1.0, %v723
      %v725 = vrcp.pop %v513
      %v726 = vmul.f32 %v513, %v725
      %v727 = vsub.f32 1.0, %v726
      %v728 = vmul.f32 %v725, %v727
      %v729 = vadd.f32 %v725, %v728
      %vm730 = vweird.f32 %v513
      %vm731 = vweird.f32 %v725
      %vm732 = vmor %vm730, %vm731
      %v733 = vsel %vm732, %v725, %v729
      %v734 = vand.u32 2147483647, %v513
      %vm735 = vcmp.eq.f32.partialorder %v734, 8.507059e+37
      %v736 = vand.u32 %v513, 2147483648
      %v737 = vor.u32 1.1754944e-38, %v736
      %v738 = vsel %vm735, %v737, %v733
      %v739 = vmul.f32 1.0, %v738
      %v740 = vrcp.pop %v514
      %v741 = vmul.f32 %v514, %v740
      %v742 = vsub.f32 1.0, %v741
      %v743 = vmul.f32 %v740, %v742
      %v744 = vadd.f32 %v740, %v743
      %vm745 = vweird.f32 %v514
      %vm746 = vweird.f32 %v740
      %vm747 = vmor %vm745, %vm746
      %v748 = vsel %vm747, %v740, %v744
      %v749 = vand.u32 2147483647, %v514
      %vm750 = vcmp.eq.f32.partialorder %v749, 8.507059e+37
      %v751 = vand.u32 %v514, 2147483648
      %v752 = vor.u32 1.1754944e-38, %v751
      %v753 = vsel %vm750, %v752, %v748
      %v754 = vmul.f32 1.0, %v753
      %755 = vst [vmem:[%s238] sm:$0xff] %v529
      %756 = vst [vmem:[%s238 + $0x8] sm:$0xff] %v544
      %757 = vst [vmem:[%s238 + $0x10] sm:$0xff] %v559
      %758 = vst [vmem:[%s238 + $0x18] sm:$0xff] %v574
      %759 = vst [vmem:[%s238 + $0x20] sm:$0xff] %v589
      %760 = vst [vmem:[%s238 + $0x28] sm:$0xff] %v604
      %761 = vst [vmem:[%s238 + $0x30] sm:$0xff] %v619
      %762 = vst [vmem:[%s238 + $0x38] sm:$0xff] %v634
      %763 = vst [vmem:[%s238 + $0x40] sm:$0xff] %v649
      %764 = vst [vmem:[%s238 + $0x48] sm:$0xff] %v664
      %765 = vst [vmem:[%s238 + $0x50] sm:$0xff] %v679
      %766 = vst [vmem:[%s238 + $0x58] sm:$0xff] %v694
      %767 = vst [vmem:[%s238 + $0x60] sm:$0xff] %v709
      %768 = vst [vmem:[%s238 + $0x68] sm:$0xff] %v724
      %769 = vst [vmem:[%s238 + $0x70] sm:$0xff] %v739
      %770 = vst [vmem:[%s238 + $0x78] sm:$0xff] %v754
      %vm771 = vcmp.gt.f32.partialorder %v529, 0.01
      %vm772 = vcmp.gt.f32.partialorder %v544, 0.01
      %vm773 = vcmp.gt.f32.partialorder %v559, 0.01
      %vm774 = vcmp.gt.f32.partialorder %v574, 0.01
      %vm775 = vcmp.gt.f32.partialorder %v589, 0.01
      %vm776 = vcmp.gt.f32.partialorder %v604, 0.01
      %vm777 = vcmp.gt.f32.partialorder %v619, 0.01
      %vm778 = vcmp.gt.f32.partialorder %v634, 0.01
      %vm779 = vcmp.gt.f32.partialorder %v649, 0.01
      %vm780 = vcmp.gt.f32.partialorder %v664, 0.01
      %vm781 = vcmp.gt.f32.partialorder %v679, 0.01
      %vm782 = vcmp.gt.f32.partialorder %v694, 0.01
      %vm783 = vcmp.gt.f32.partialorder %v709, 0.01
      %vm784 = vcmp.gt.f32.partialorder %v724, 0.01
      %vm785 = vcmp.gt.f32.partialorder %v739, 0.01
      %vm786 = vcmp.gt.f32.partialorder %v754, 0.01
      %v787 = vsel %vm771, 1, 0
      %v788 = vsel %vm772, 1, 0
      %v789 = vsel %vm773, 1, 0
      %v790 = vsel %vm774, 1, 0
      %v791 = vsel %vm775, 1, 0
      %v792 = vsel %vm776, 1, 0
      %v793 = vsel %vm777, 1, 0
      %v794 = vsel %vm778, 1, 0
      %v795 = vsel %vm779, 1, 0
      %v796 = vsel %vm780, 1, 0
      %v797 = vsel %vm781, 1, 0
      %v798 = vsel %vm782, 1, 0
      %v799 = vsel %vm783, 1, 0
      %v800 = vsel %vm784, 1, 0
      %v801 = vsel %vm785, 1, 0
      %v802 = vsel %vm786, 1, 0
      %v803 = vadd.s32 %v787, %v791
      %v804 = vadd.s32 %v788, %v792
      %v805 = vadd.s32 %v789, %v793
      %v806 = vadd.s32 %v790, %v794
      %v807 = vadd.s32 %v803, %v795
      %v808 = vadd.s32 %v804, %v796
      %v809 = vadd.s32 %v805, %v797
      %v810 = vadd.s32 %v806, %v798
      %v811 = vadd.s32 %v807, %v799
      %v812 = vadd.s32 %v808, %v800
      %v813 = vadd.s32 %v809, %v801
      %v814 = vadd.s32 %v810, %v802
      %v815 = vadd.s32 %v811, %v812
      %v816 = vadd.s32 %v813, %v814
      %v817 = vadd.s32 %v815, %v816
      %v818 = vand.u32 %v817, 65535
      %v819 = vshrl.u32 %v817, 16
      %v820 = vcvt.s32.f32 %v818
      %v821 = vcvt.s32.f32 %v819
      %822 = vadd.xlane.f32.xlu0 %v820
      %v823 = vpop.xlane.xlu0 %822
      %824 = vadd.xlane.f32.xlu0 %v821
      %v825 = vpop.xlane.xlu0 %824
      %v826 = vcvt.f32.s32 %v823
      %v827 = vcvt.f32.s32 %v825
      %v828 = vshll.u32 %v827, 16
      %v829 = vadd.s32 %v828, %v826
      %830 = vst [vmem:[%s242] sm:$0xff] %v829
      %p831 = scmp.lt.s32.totalorder %s16, 3
      %s832 = scalar_select %p831, %s16, 3
      %s833 = smul.addr %s832, 16
      %s834 = smul.addr %s833, 8
      %s835 = scalar_lea.vmem %s3, %s834
      %p836 = scmp.lt.s32.totalorder %s16, 3
      %s837 = scalar_select %p836, %s16, 3
      %s838 = smul.addr %s837, 8
      %s839 = scalar_lea.vmem %s4, %s838
      // Predicated region
      $region33: #{fwd.1} parent=31 // pred_check
        %p840 = pneg %p112
      $region34: #{fwd.1} parent=31 // pred_check_branch
        %842 = sbr.rel (%p840) target = $region36
      $region35: #{fwd.1} parent=31 // pred_region
        _
      $region36: #{fwd.1} parent=31 // pred_fallthru
        _
      // Predicated region
      $region37: #{fwd.1} parent=31 // pred_check
        %p843 = pneg %p138
      $region38: #{fwd.1} parent=31 // pred_check_branch
        %845 = sbr.rel (%p843) target = $region40
      $region39: #{fwd.1} parent=31 // pred_region
        _
      $region40: #{fwd.1} parent=31 // pred_fallthru
        _
    $region32: #{fwd.1} parent=5 // pred_fallthru
      _
    %p846 = scmp.le.s32.totalorder 2, %s11
    // Predicated region
    $region41: #{fwd.1} parent=5 // pred_check
      %p847 = pneg %p846
    $region42: #{fwd.1} parent=5 // pred_check_branch
      %849 = sbr.rel (%p847) target = $region44
    $region43: #{fwd.1} parent=5 // pred_region
      %s850 = ssub.s32 %s11, 2
      // Predicated region
      $region45: #{fwd.1} parent=43 // pred_check
        %p851 = pneg %p118
      $region46: #{fwd.1} parent=43 // pred_check_branch
        %853 = sbr.rel (%p851) target = $region48
      $region47: #{fwd.1} parent=43 // pred_region
        %p854 = scmp.lt.s32.totalorder %s17, 3
        %s855 = scalar_select %p854, %s17, 3
        %s856 = smul.addr %s855, 16
        %s857 = smul.addr %s856, 8
        %s858 = scalar_lea.vmem %s3, %s857
      $region48: #{fwd.1} parent=43 // pred_fallthru
        _
      // Predicated region
      $region49: #{fwd.1} parent=43 // pred_check
        %p859 = pneg %p144
      $region50: #{fwd.1} parent=43 // pred_check_branch
        %861 = sbr.rel (%p859) target = $region52
      $region51: #{fwd.1} parent=43 // pred_region
        %p862 = scmp.lt.s32.totalorder %s17, 3
        %s863 = scalar_select %p862, %s17, 3
        %s864 = smul.addr %s863, 8
        %s865 = scalar_lea.vmem %s4, %s864
      $region52: #{fwd.1} parent=43 // pred_fallthru
        _
    $region44: #{fwd.1} parent=5 // pred_fallthru
      _
  $region6: #{fwd.1} parent=0 // loop_footer
    %s15 = sadd.s32 1, %s11
  $region7: #{fwd.1} parent=0 // loop_footer_branch
    %10 = sbr.rel target = $region3
  $region8: #{fwd.1} parent=0 // loop_exit
    _

</llo_original>
